<compile_context>
chip_gen: v6e
topology: v6e:2x2x1
jax: 0.10.0
libtpu: 0.0.40
codegen_flags: <defaults>
</compile_context>

<pallas_src>
import jax
import jax.numpy as jnp
from jax import lax
from jax.experimental import pallas as pl
from jax.experimental.pallas import tpu as pltpu


def _gru_pair_kernel(x_ref, len_ref,
                     wih_ref, whh_ref, bx_ref, bhn_ref,
                     wla_ref, wlb_ref, blin_ref,
                     out_ref):
    """One batch tile: fused two-sentence GRU recurrence + classifier."""
    T, BB, Hp = x_ref.shape          # BB = 2 * batch_tile (s1 rows then s2 rows)
    bt = BB // 2
    f32 = jnp.float32

    # ---- Hoisted, fused input-to-hidden projection: ONE big MXU matmul ----
    x2d = x_ref[...].reshape(T * BB, Hp)
    xg = jnp.dot(x2d, wih_ref[...], preferred_element_type=f32) + bx_ref[...]
    xg = xg.astype(x_ref.dtype).reshape(T, BB, 3 * Hp)   # gates [r | z | n]

    whh = whh_ref[...]                                             # (Hp, 3Hp)
    bhn = jnp.broadcast_to(bhn_ref[...], (BB, Hp)).astype(f32)     # hoisted

    lens = len_ref[...].reshape(BB, 1)                             # int32

    # ---- Serial recurrence: ONE fused hidden matmul per step ----
    # TODO(synk): use lax.fori_loop + VMEM scratch for xg once T >= ~32.
    h = jnp.zeros((BB, Hp), f32)
    for t in range(T):
        hg = jnp.dot(h.astype(whh.dtype), whh, preferred_element_type=f32)
        xg_t = xg[t]
        r = jax.nn.sigmoid(xg_t[:, :Hp] + hg[:, :Hp])
        z = jax.nn.sigmoid(xg_t[:, Hp:2 * Hp] + hg[:, Hp:2 * Hp])
        n = jnp.tanh(xg_t[:, 2 * Hp:] + r * (hg[:, 2 * Hp:] + bhn))
        keep = (lens > t).astype(f32)              # (BB, 1) per-step mask
        # h_new = (1-z)*n + z*h, frozen (pack_padded_sequence) once t >= len:
        h = h + keep * (1.0 - z) * (n - h)

    h1 = h[:bt, :]                                  # sentence-1 final hidden
    h2 = h[bt:, :]                                  # sentence-2 final hidden

    # ---- Split-linear classifier (no lane-axis concat) + softmax ----
    logits = (jnp.dot(h1.astype(wla_ref.dtype), wla_ref[...],
                      preferred_element_type=f32)
              + jnp.dot(h2.astype(wlb_ref.dtype), wlb_ref[...],
                        preferred_element_type=f32)
              + blin_ref[...])
    # TODO(synk): dropout is identity (eval mode); training dropout not modeled.
    out_ref[...] = jax.nn.softmax(logits, axis=-1).astype(out_ref.dtype)


def prepare_kernel_params(params, *, matmul_dtype=jnp.float32, lane=128):
    """One-time weight prep: transpose/split/pad/fuse (call OUTSIDE jit)."""
    emb = params["embedding"]        # (V, H)
    w_ih = params["w_ih"]            # (3H, H), PyTorch layout, gates [r|z|n]
    w_hh = params["w_hh"]            # (3H, H)
    b_ih = params["b_ih"]            # (3H,)
    b_hh = params["b_hh"]            # (3H,)
    w_lin = params["w_lin"]          # (C, 2H)
    b_lin = params["b_lin"]          # (C,)

    H = emb.shape[1]
    C = w_lin.shape[0]
    Hp = ((H + lane - 1) // lane) * lane             # pad H to a lane multiple

    def pad2(a, rows, cols):
        return jnp.pad(a, ((0, rows - a.shape[0]), (0, cols - a.shape[1])))

    def gate_block(w, g):            # (3H, H) -> (Hp, Hp) block for x @ W
        return pad2(w[g * H:(g + 1) * H, :].T, Hp, Hp)

    # Fused (Hp, 3Hp) weights, gate order [r | z | n] along the lane axis.
    w_ih_cat = jnp.concatenate([gate_block(w_ih, g) for g in range(3)], axis=1)
    w_hh_cat = jnp.concatenate([gate_block(w_hh, g) for g in range(3)], axis=1)

    def pad_vec(v):
        return jnp.pad(v, (0, Hp - H)).reshape(1, Hp)

    # r/z gates: both biases fold into the hoisted XG; n gate: b_in only
    # (b_hn must stay separate — it is scaled by r in the recurrence).
    b_x_cat = jnp.concatenate([pad_vec(b_ih[0:H] + b_hh[0:H]),
                               pad_vec(b_ih[H:2 * H] + b_hh[H:2 * H]),
                               pad_vec(b_ih[2 * H:3 * H])], axis=1)   # (1, 3Hp)
    b_hn = pad_vec(b_hh[2 * H:3 * H])                                  # (1, Hp)

    # Split classifier so the kernel never concats h1/h2 along lanes.
    w_lin_a = pad2(w_lin[:, :H].T, Hp, C)            # (Hp, C)
    w_lin_b = pad2(w_lin[:, H:].T, Hp, C)            # (Hp, C)
    b_lin2 = b_lin.reshape(1, C)

    md = matmul_dtype
    return {
        "emb": pad2(emb, emb.shape[0], Hp).astype(md),
        "w_ih_cat": w_ih_cat.astype(md),
        "w_hh_cat": w_hh_cat.astype(md),
        "b_x_cat": b_x_cat.astype(jnp.float32),
        "b_hn": b_hn.astype(jnp.float32),
        "w_lin_a": w_lin_a.astype(md),
        "w_lin_b": w_lin_b.astype(md),
        "b_lin": b_lin2.astype(jnp.float32),
    }


def rnn_pair_classify(s1_ids, s2_ids, s1_lengths, s2_lengths, prep, *,
                      b_tile=None):
    """Embedding gather (JAX glue) + batch-tiled Pallas GRU/linear/softmax."""
    emb_p = prep["emb"]
    Hp = emb_p.shape[1]
    C = prep["w_lin_a"].shape[1]
    B, T = s1_ids.shape

    # Batch tile (sublane multiple of 8); pad batch so the grid divides evenly.
    # Guideline: ~128 examples (256 stacked rows) per tile on v6e/v7x, ~64 on v5e.
    b8 = ((B + 7) // 8) * 8
    if b_tile is None:
        b_tile = 128
    bt = max(8, (min(int(b_tile), b8) // 8) * 8)
    Bp = ((B + bt - 1) // bt) * bt
    nt = Bp // bt

    def pad_batch(a):
        widths = ((0, Bp - B),) + ((0, 0),) * (a.ndim - 1)
        return jnp.pad(a, widths)                    # pad ids=0 / lens=0

    s1p = pad_batch(s1_ids)
    s2p = pad_batch(s2_ids)
    l1p = pad_batch(s1_lengths.astype(jnp.int32))
    l2p = pad_batch(s2_lengths.astype(jnp.int32))

    # Tile-interleaved stacked-pair ordering (cheap: done on the tiny id/len
    # arrays BEFORE the gather): [tile0-s1 | tile0-s2 | tile1-s1 | ...] so each
    # grid step owns complete sentence pairs.
    ids = jnp.stack([s1p.reshape(nt, bt, T),
                     s2p.reshape(nt, bt, T)], axis=1).reshape(2 * Bp, T)
    lens = jnp.stack([l1p.reshape(nt, bt),
                      l2p.reshape(nt, bt)], axis=1).reshape(2 * Bp, 1)

    # Single gather on the stacked ids, directly time-major: (T, 2*Bp, Hp).
    x = emb_p[ids.T]

    grid = (nt,)
    out = pl.pallas_call(
        _gru_pair_kernel,
        out_shape=jax.ShapeDtypeStruct((Bp, C), jnp.float32),
        grid=grid,
        in_specs=[
            pl.BlockSpec((T, 2 * bt, Hp), lambda b: (0, b, 0)),   # x
            pl.BlockSpec((2 * bt, 1), lambda b: (b, 0)),          # lens
            pl.BlockSpec((Hp, 3 * Hp), lambda b: (0, 0)),         # W_ih fused
            pl.BlockSpec((Hp, 3 * Hp), lambda b: (0, 0)),         # W_hh fused
            pl.BlockSpec((1, 3 * Hp), lambda b: (0, 0)),          # folded x-bias
            pl.BlockSpec((1, Hp), lambda b: (0, 0)),              # b_hn
            pl.BlockSpec((Hp, C), lambda b: (0, 0)),              # W_lin (h1)
            pl.BlockSpec((Hp, C), lambda b: (0, 0)),              # W_lin (h2)
            pl.BlockSpec((1, C), lambda b: (0, 0)),               # b_lin
        ],
        out_specs=pl.BlockSpec((bt, C), lambda b: (b, 0)),
        compiler_params=pltpu.CompilerParams(
            dimension_semantics=("parallel",)),
    )(x, lens,
      prep["w_ih_cat"], prep["w_hh_cat"], prep["b_x_cat"], prep["b_hn"],
      prep["w_lin_a"], prep["w_lin_b"], prep["b_lin"])
    return out[:B]


def init_params(key, vocab_size, hidden_size, num_classes):
    """Parameters in PyTorch layout (nn.GRU / nn.Linear conventions)."""
    ks = jax.random.split(key, 7)
    scale = 1.0 / jnp.sqrt(hidden_size)
    emb = jax.random.normal(ks[0], (vocab_size, hidden_size), jnp.float32) * 0.1
    emb = emb.at[0].set(0.0)                             # padding_idx=0
    w_ih = jax.random.uniform(ks[1], (3 * hidden_size, hidden_size),
                              jnp.float32, -scale, scale)
    w_hh = jax.random.uniform(ks[2], (3 * hidden_size, hidden_size),
                              jnp.float32, -scale, scale)
    b_ih = jax.random.uniform(ks[3], (3 * hidden_size,), jnp.float32,
                              -scale, scale)
    b_hh = jax.random.uniform(ks[4], (3 * hidden_size,), jnp.float32,
                              -scale, scale)
    lin_scale = 1.0 / jnp.sqrt(2.0 * hidden_size)
    w_lin = jax.random.uniform(ks[5], (num_classes, 2 * hidden_size),
                               jnp.float32, -lin_scale, lin_scale)
    b_lin = jax.random.uniform(ks[6], (num_classes,), jnp.float32,
                               -lin_scale, lin_scale)
    return {"embedding": emb, "w_ih": w_ih, "w_hh": w_hh,
            "b_ih": b_ih, "b_hh": b_hh, "w_lin": w_lin, "b_lin": b_lin}


def _reference(s1_ids, s2_ids, s1_lengths, s2_lengths, params):
    """Pure-JAX reference mirroring the PyTorch forward (eval mode)."""
    emb = params["embedding"]
    H = emb.shape[1]
    w_ih_t = params["w_ih"].T                            # (H, 3H)
    w_hh_t = params["w_hh"].T
    b_ih = params["b_ih"].reshape(1, -1)
    b_hh = params["b_hh"].reshape(1, -1)

    def gru_last_hidden(ids, lengths):
        x = emb[ids].astype(jnp.float32)                 # (B, T, H)
        B, T, _ = x.shape
        h = jnp.zeros((B, H), jnp.float32)
        for t in range(T):
            x_t = x[:, t, :]
            xg = x_t @ w_ih_t + b_ih
            hg = h @ w_hh_t + b_hh
            r = jax.nn.sigmoid(xg[:, :H] + hg[:, :H])
            z = jax.nn.sigmoid(xg[:, H:2 * H] + hg[:, H:2 * H])
            n = jnp.tanh(xg[:, 2 * H:] + r * hg[:, 2 * H:])
            h_new = (1.0 - z) * n + z * h
            h = jnp.where((t < lengths)[:, None], h_new, h)
        return h

    h1 = gru_last_hidden(s1_ids, s1_lengths)
    h2 = gru_last_hidden(s2_ids, s2_lengths)
    hidden = jnp.concatenate([h1, h2], axis=-1)
    logits_pre = hidden @ params["w_lin"].T + params["b_lin"][None, :]
    return jax.nn.softmax(logits_pre, axis=-1)


if __name__ == "__main__":
    VOCAB, HIDDEN, NUM_CLASSES = 50, 32, 2
    BATCH, SEQ = 4, 8

    key = jax.random.PRNGKey(0)
    k_param, k_s1, k_s2, k_l1, k_l2, k_b = jax.random.split(key, 6)

    params = init_params(k_param, VOCAB, HIDDEN, NUM_CLASSES)
    s1_ids = jax.random.randint(k_s1, (BATCH, SEQ), 1, VOCAB, dtype=jnp.int32)
    s2_ids = jax.random.randint(k_s2, (BATCH, SEQ), 1, VOCAB, dtype=jnp.int32)
    s1_lengths = jax.random.randint(k_l1, (BATCH,), 1, SEQ + 1, dtype=jnp.int32)
    s2_lengths = jax.random.randint(k_l2, (BATCH,), 1, SEQ + 1, dtype=jnp.int32)

    # Weight transposes/splits/pads/fusion done ONCE, outside the jitted fwd.
    prep_f32 = prepare_kernel_params(params)
    fwd = jax.jit(rnn_pair_classify, static_argnames=("b_tile",))

    # 1) f32 path, single batch tile.
    probs = fwd(s1_ids, s2_ids, s1_lengths, s2_lengths, prep_f32, b_tile=8)
    jax.block_until_ready(probs)
    assert probs.shape == (BATCH, NUM_CLASSES)
    ref = _reference(s1_ids, s2_ids, s1_lengths, s2_lengths, params)
    assert jnp.allclose(probs, ref, atol=1e-3, rtol=1e-3), (probs, ref)

    # 2) f32 path with a batch-tiled grid (grid > 1, "parallel" semantics).
    B2 = 12
    ks = jax.random.split(k_b, 4)
    s1b = jax.random.randint(ks[0], (B2, SEQ), 1, VOCAB, dtype=jnp.int32)
    s2b = jax.random.randint(ks[1], (B2, SEQ), 1, VOCAB, dtype=jnp.int32)
    l1b = jax.random.randint(ks[2], (B2,), 1, SEQ + 1, dtype=jnp.int32)
    l2b = jax.random.randint(ks[3], (B2,), 1, SEQ + 1, dtype=jnp.int32)
    probs2 = fwd(s1b, s2b, l1b, l2b, prep_f32, b_tile=8)
    jax.block_until_ready(probs2)
    ref2 = _reference(s1b, s2b, l1b, l2b, params)
    assert probs2.shape == (B2, NUM_CLASSES)
    assert jnp.allclose(probs2, ref2, atol=1e-3, rtol=1e-3), (probs2, ref2)

    # 3) bf16 matmul-operand path (v6e/v7x MXU); gate math / h remain f32.
    prep_bf16 = prepare_kernel_params(params, matmul_dtype=jnp.bfloat16)
    probs_bf16 = fwd(s1_ids, s2_ids, s1_lengths, s2_lengths, prep_bf16,
                     b_tile=8)
    jax.block_until_ready(probs_bf16)
    assert jnp.allclose(probs_bf16, ref, atol=5e-2, rtol=5e-2), (probs_bf16, ref)

    print("KERNEL_OK")
</pallas_src>

<mosaic_0001>
module attributes {stable_mosaic.version = 11 : i64} {
  func.func @_gru_pair_kernel(%arg0: i32, %arg1: memref<8x16x128xf32, #tpu.memory_space<vmem>>, %arg2: memref<16x1xi32, #tpu.memory_space<vmem>>, %arg3: memref<128x384xf32, #tpu.memory_space<vmem>>, %arg4: memref<128x384xf32, #tpu.memory_space<vmem>>, %arg5: memref<1x384xf32, #tpu.memory_space<vmem>>, %arg6: memref<1x128xf32, #tpu.memory_space<vmem>>, %arg7: memref<128x2xf32, #tpu.memory_space<vmem>>, %arg8: memref<128x2xf32, #tpu.memory_space<vmem>>, %arg9: memref<1x2xf32, #tpu.memory_space<vmem>>, %arg10: memref<8x2xf32, #tpu.memory_space<vmem>>) attributes {dimension_semantics = [#tpu.dimension_semantics<parallel>], iteration_bounds = array<i64: 1>, scalar_prefetch = 0 : i64, scratch_operands = 0 : i64, tpu.core_type = #tpu.core_type<tc>, window_params = [{transform_indices = @transform_0, window_bounds = array<i64: 8, 16, 128>}, {transform_indices = @transform_1, window_bounds = array<i64: 16, 1>}, {pipeline_mode = #tpu.pipeline_mode<synchronous>, transform_indices = @transform_2, window_bounds = array<i64: 128, 384>}, {pipeline_mode = #tpu.pipeline_mode<synchronous>, transform_indices = @transform_3, window_bounds = array<i64: 128, 384>}, {pipeline_mode = #tpu.pipeline_mode<synchronous>, transform_indices = @transform_4, window_bounds = array<i64: 1, 384>}, {pipeline_mode = #tpu.pipeline_mode<synchronous>, transform_indices = @transform_5, window_bounds = array<i64: 1, 128>}, {pipeline_mode = #tpu.pipeline_mode<synchronous>, transform_indices = @transform_6, window_bounds = array<i64: 128, 2>}, {pipeline_mode = #tpu.pipeline_mode<synchronous>, transform_indices = @transform_7, window_bounds = array<i64: 128, 2>}, {pipeline_mode = #tpu.pipeline_mode<synchronous>, transform_indices = @transform_8, window_bounds = array<i64: 1, 2>}, {transform_indices = @transform_9, window_bounds = array<i64: 8, 2>}]} {
    %c0 = arith.constant 0 : index
    %c0_0 = arith.constant 0 : index
    %c0_1 = arith.constant 0 : index
    %0 = vector.load %arg1[%c0, %c0_0, %c0_1] : memref<8x16x128xf32, #tpu.memory_space<vmem>>, vector<8x16x128xf32>
    %1 = vector.shape_cast %0 : vector<8x16x128xf32> to vector<128x128xf32>
    %c0_2 = arith.constant 0 : index
    %c0_3 = arith.constant 0 : index
    %2 = vector.load %arg3[%c0_2, %c0_3] : memref<128x384xf32, #tpu.memory_space<vmem>>, vector<128x384xf32>
    %cst = arith.constant dense<0.000000e+00> : vector<128x384xf32>
    %3 = tpu.matmul %1, %2, %cst {dimension_numbers = #tpu.dot_dimension_numbers<[1], [0], [0], [1], [0, 0, 1, 1], [], []>} : vector<128x128xf32>, vector<128x384xf32>, vector<128x384xf32> -> vector<128x384xf32>
    %c0_4 = arith.constant 0 : index
    %c0_5 = arith.constant 0 : index
    %4 = vector.load %arg5[%c0_4, %c0_5] : memref<1x384xf32, #tpu.memory_space<vmem>>, vector<1x384xf32>
    %5 = vector.broadcast %4 : vector<1x384xf32> to vector<128x384xf32>
    %6 = arith.addf %3, %5 : vector<128x384xf32>
    %7 = vector.shape_cast %6 : vector<128x384xf32> to vector<8x16x384xf32>
    %c0_6 = arith.constant 0 : index
    %c0_7 = arith.constant 0 : index
    %8 = vector.load %arg4[%c0_6, %c0_7] : memref<128x384xf32, #tpu.memory_space<vmem>>, vector<128x384xf32>
    %c0_8 = arith.constant 0 : index
    %c0_9 = arith.constant 0 : index
    %9 = vector.load %arg6[%c0_8, %c0_9] : memref<1x128xf32, #tpu.memory_space<vmem>>, vector<1x128xf32>
    %10 = vector.shape_cast %9 : vector<1x128xf32> to vector<1x128xf32>
    %11 = vector.broadcast %10 : vector<1x128xf32> to vector<16x128xf32>
    %c0_10 = arith.constant 0 : index
    %c0_11 = arith.constant 0 : index
    %12 = vector.load %arg2[%c0_10, %c0_11] : memref<16x1xi32, #tpu.memory_space<vmem>>, vector<16x1xi32>
    %cst_12 = arith.constant 0.000000e+00 : f32
    %13 = vector.broadcast %cst_12 : f32 to vector<16x128xf32>
    %cst_13 = arith.constant dense<0.000000e+00> : vector<16x384xf32>
    %14 = tpu.matmul %13, %8, %cst_13 {dimension_numbers = #tpu.dot_dimension_numbers<[1], [0], [0], [1], [0, 0, 1, 1], [], []>} : vector<16x128xf32>, vector<128x384xf32>, vector<16x384xf32> -> vector<16x384xf32>
    %15 = vector.extract_strided_slice %7 {offsets = [0, 0, 0], sizes = [1, 16, 384], strides = [1, 1, 1]} : vector<8x16x384xf32> to vector<1x16x384xf32>
    %16 = vector.shape_cast %15 : vector<1x16x384xf32> to vector<16x384xf32>
    %17 = vector.extract_strided_slice %16 {offsets = [0, 0], sizes = [16, 128], strides = [1, 1]} : vector<16x384xf32> to vector<16x128xf32>
    %18 = vector.extract_strided_slice %14 {offsets = [0, 0], sizes = [16, 128], strides = [1, 1]} : vector<16x384xf32> to vector<16x128xf32>
    %19 = arith.addf %17, %18 : vector<16x128xf32>
    %20 = arith.negf %19 : vector<16x128xf32>
    %21 = math.exp %20 : vector<16x128xf32>
    %cst_14 = arith.constant 1.000000e+00 : f32
    %22 = vector.broadcast %cst_14 : f32 to vector<16x128xf32>
    %23 = arith.addf %22, %21 : vector<16x128xf32>
    %24 = arith.divf %22, %23 : vector<16x128xf32>
    %25 = vector.extract_strided_slice %16 {offsets = [0, 128], sizes = [16, 128], strides = [1, 1]} : vector<16x384xf32> to vector<16x128xf32>
    %26 = vector.extract_strided_slice %14 {offsets = [0, 128], sizes = [16, 128], strides = [1, 1]} : vector<16x384xf32> to vector<16x128xf32>
    %27 = arith.addf %25, %26 : vector<16x128xf32>
    %28 = arith.negf %27 : vector<16x128xf32>
    %29 = math.exp %28 : vector<16x128xf32>
    %cst_15 = arith.constant 1.000000e+00 : f32
    %30 = vector.broadcast %cst_15 : f32 to vector<16x128xf32>
    %31 = arith.addf %30, %29 : vector<16x128xf32>
    %32 = arith.divf %30, %31 : vector<16x128xf32>
    %33 = vector.extract_strided_slice %16 {offsets = [0, 256], sizes = [16, 128], strides = [1, 1]} : vector<16x384xf32> to vector<16x128xf32>
    %34 = vector.extract_strided_slice %14 {offsets = [0, 256], sizes = [16, 128], strides = [1, 1]} : vector<16x384xf32> to vector<16x128xf32>
    %35 = arith.addf %34, %11 : vector<16x128xf32>
    %36 = arith.mulf %24, %35 : vector<16x128xf32>
    %37 = arith.addf %33, %36 : vector<16x128xf32>
    %38 = math.tanh %37 : vector<16x128xf32>
    %c0_i32 = arith.constant 0 : i32
    %39 = vector.broadcast %c0_i32 : i32 to vector<16x1xi32>
    %40 = arith.cmpi sgt, %12, %39 : vector<16x1xi32>
    %41 = arith.extui %40 : vector<16x1xi1> to vector<16x1xi32>
    %42 = arith.sitofp %41 : vector<16x1xi32> to vector<16x1xf32>
    %cst_16 = arith.constant 1.000000e+00 : f32
    %43 = vector.broadcast %cst_16 : f32 to vector<16x128xf32>
    %44 = arith.subf %43, %32 : vector<16x128xf32>
    %45 = vector.broadcast %42 : vector<16x1xf32> to vector<16x128xf32>
    %46 = arith.mulf %45, %44 : vector<16x128xf32>
    %47 = arith.subf %38, %13 : vector<16x128xf32>
    %48 = arith.mulf %46, %47 : vector<16x128xf32>
    %49 = arith.addf %13, %48 : vector<16x128xf32>
    %cst_17 = arith.constant dense<0.000000e+00> : vector<16x384xf32>
    %50 = tpu.matmul %49, %8, %cst_17 {dimension_numbers = #tpu.dot_dimension_numbers<[1], [0], [0], [1], [0, 0, 1, 1], [], []>} : vector<16x128xf32>, vector<128x384xf32>, vector<16x384xf32> -> vector<16x384xf32>
    %51 = vector.extract_strided_slice %7 {offsets = [1, 0, 0], sizes = [1, 16, 384], strides = [1, 1, 1]} : vector<8x16x384xf32> to vector<1x16x384xf32>
    %52 = vector.shape_cast %51 : vector<1x16x384xf32> to vector<16x384xf32>
    %53 = vector.extract_strided_slice %52 {offsets = [0, 0], sizes = [16, 128], strides = [1, 1]} : vector<16x384xf32> to vector<16x128xf32>
    %54 = vector.extract_strided_slice %50 {offsets = [0, 0], sizes = [16, 128], strides = [1, 1]} : vector<16x384xf32> to vector<16x128xf32>
    %55 = arith.addf %53, %54 : vector<16x128xf32>
    %56 = arith.negf %55 : vector<16x128xf32>
    %57 = math.exp %56 : vector<16x128xf32>
    %cst_18 = arith.constant 1.000000e+00 : f32
    %58 = vector.broadcast %cst_18 : f32 to vector<16x128xf32>
    %59 = arith.addf %58, %57 : vector<16x128xf32>
    %60 = arith.divf %58, %59 : vector<16x128xf32>
    %61 = vector.extract_strided_slice %52 {offsets = [0, 128], sizes = [16, 128], strides = [1, 1]} : vector<16x384xf32> to vector<16x128xf32>
    %62 = vector.extract_strided_slice %50 {offsets = [0, 128], sizes = [16, 128], strides = [1, 1]} : vector<16x384xf32> to vector<16x128xf32>
    %63 = arith.addf %61, %62 : vector<16x128xf32>
    %64 = arith.negf %63 : vector<16x128xf32>
    %65 = math.exp %64 : vector<16x128xf32>
    %cst_19 = arith.constant 1.000000e+00 : f32
    %66 = vector.broadcast %cst_19 : f32 to vector<16x128xf32>
    %67 = arith.addf %66, %65 : vector<16x128xf32>
    %68 = arith.divf %66, %67 : vector<16x128xf32>
    %69 = vector.extract_strided_slice %52 {offsets = [0, 256], sizes = [16, 128], strides = [1, 1]} : vector<16x384xf32> to vector<16x128xf32>
    %70 = vector.extract_strided_slice %50 {offsets = [0, 256], sizes = [16, 128], strides = [1, 1]} : vector<16x384xf32> to vector<16x128xf32>
    %71 = arith.addf %70, %11 : vector<16x128xf32>
    %72 = arith.mulf %60, %71 : vector<16x128xf32>
    %73 = arith.addf %69, %72 : vector<16x128xf32>
    %74 = math.tanh %73 : vector<16x128xf32>
    %c1_i32 = arith.constant 1 : i32
    %75 = vector.broadcast %c1_i32 : i32 to vector<16x1xi32>
    %76 = arith.cmpi sgt, %12, %75 : vector<16x1xi32>
    %77 = arith.extui %76 : vector<16x1xi1> to vector<16x1xi32>
    %78 = arith.sitofp %77 : vector<16x1xi32> to vector<16x1xf32>
    %cst_20 = arith.constant 1.000000e+00 : f32
    %79 = vector.broadcast %cst_20 : f32 to vector<16x128xf32>
    %80 = arith.subf %79, %68 : vector<16x128xf32>
    %81 = vector.broadcast %78 : vector<16x1xf32> to vector<16x128xf32>
    %82 = arith.mulf %81, %80 : vector<16x128xf32>
    %83 = arith.subf %74, %49 : vector<16x128xf32>
    %84 = arith.mulf %82, %83 : vector<16x128xf32>
    %85 = arith.addf %49, %84 : vector<16x128xf32>
    %cst_21 = arith.constant dense<0.000000e+00> : vector<16x384xf32>
    %86 = tpu.matmul %85, %8, %cst_21 {dimension_numbers = #tpu.dot_dimension_numbers<[1], [0], [0], [1], [0, 0, 1, 1], [], []>} : vector<16x128xf32>, vector<128x384xf32>, vector<16x384xf32> -> vector<16x384xf32>
    %87 = vector.extract_strided_slice %7 {offsets = [2, 0, 0], sizes = [1, 16, 384], strides = [1, 1, 1]} : vector<8x16x384xf32> to vector<1x16x384xf32>
    %88 = vector.shape_cast %87 : vector<1x16x384xf32> to vector<16x384xf32>
    %89 = vector.extract_strided_slice %88 {offsets = [0, 0], sizes = [16, 128], strides = [1, 1]} : vector<16x384xf32> to vector<16x128xf32>
    %90 = vector.extract_strided_slice %86 {offsets = [0, 0], sizes = [16, 128], strides = [1, 1]} : vector<16x384xf32> to vector<16x128xf32>
    %91 = arith.addf %89, %90 : vector<16x128xf32>
    %92 = arith.negf %91 : vector<16x128xf32>
    %93 = math.exp %92 : vector<16x128xf32>
    %cst_22 = arith.constant 1.000000e+00 : f32
    %94 = vector.broadcast %cst_22 : f32 to vector<16x128xf32>
    %95 = arith.addf %94, %93 : vector<16x128xf32>
    %96 = arith.divf %94, %95 : vector<16x128xf32>
    %97 = vector.extract_strided_slice %88 {offsets = [0, 128], sizes = [16, 128], strides = [1, 1]} : vector<16x384xf32> to vector<16x128xf32>
    %98 = vector.extract_strided_slice %86 {offsets = [0, 128], sizes = [16, 128], strides = [1, 1]} : vector<16x384xf32> to vector<16x128xf32>
    %99 = arith.addf %97, %98 : vector<16x128xf32>
    %100 = arith.negf %99 : vector<16x128xf32>
    %101 = math.exp %100 : vector<16x128xf32>
    %cst_23 = arith.constant 1.000000e+00 : f32
    %102 = vector.broadcast %cst_23 : f32 to vector<16x128xf32>
    %103 = arith.addf %102, %101 : vector<16x128xf32>
    %104 = arith.divf %102, %103 : vector<16x128xf32>
    %105 = vector.extract_strided_slice %88 {offsets = [0, 256], sizes = [16, 128], strides = [1, 1]} : vector<16x384xf32> to vector<16x128xf32>
    %106 = vector.extract_strided_slice %86 {offsets = [0, 256], sizes = [16, 128], strides = [1, 1]} : vector<16x384xf32> to vector<16x128xf32>
    %107 = arith.addf %106, %11 : vector<16x128xf32>
    %108 = arith.mulf %96, %107 : vector<16x128xf32>
    %109 = arith.addf %105, %108 : vector<16x128xf32>
    %110 = math.tanh %109 : vector<16x128xf32>
    %c2_i32 = arith.constant 2 : i32
    %111 = vector.broadcast %c2_i32 : i32 to vector<16x1xi32>
    %112 = arith.cmpi sgt, %12, %111 : vector<16x1xi32>
    %113 = arith.extui %112 : vector<16x1xi1> to vector<16x1xi32>
    %114 = arith.sitofp %113 : vector<16x1xi32> to vector<16x1xf32>
    %cst_24 = arith.constant 1.000000e+00 : f32
    %115 = vector.broadcast %cst_24 : f32 to vector<16x128xf32>
    %116 = arith.subf %115, %104 : vector<16x128xf32>
    %117 = vector.broadcast %114 : vector<16x1xf32> to vector<16x128xf32>
    %118 = arith.mulf %117, %116 : vector<16x128xf32>
    %119 = arith.subf %110, %85 : vector<16x128xf32>
    %120 = arith.mulf %118, %119 : vector<16x128xf32>
    %121 = arith.addf %85, %120 : vector<16x128xf32>
    %cst_25 = arith.constant dense<0.000000e+00> : vector<16x384xf32>
    %122 = tpu.matmul %121, %8, %cst_25 {dimension_numbers = #tpu.dot_dimension_numbers<[1], [0], [0], [1], [0, 0, 1, 1], [], []>} : vector<16x128xf32>, vector<128x384xf32>, vector<16x384xf32> -> vector<16x384xf32>
    %123 = vector.extract_strided_slice %7 {offsets = [3, 0, 0], sizes = [1, 16, 384], strides = [1, 1, 1]} : vector<8x16x384xf32> to vector<1x16x384xf32>
    %124 = vector.shape_cast %123 : vector<1x16x384xf32> to vector<16x384xf32>
    %125 = vector.extract_strided_slice %124 {offsets = [0, 0], sizes = [16, 128], strides = [1, 1]} : vector<16x384xf32> to vector<16x128xf32>
    %126 = vector.extract_strided_slice %122 {offsets = [0, 0], sizes = [16, 128], strides = [1, 1]} : vector<16x384xf32> to vector<16x128xf32>
    %127 = arith.addf %125, %126 : vector<16x128xf32>
    %128 = arith.negf %127 : vector<16x128xf32>
    %129 = math.exp %128 : vector<16x128xf32>
    %cst_26 = arith.constant 1.000000e+00 : f32
    %130 = vector.broadcast %cst_26 : f32 to vector<16x128xf32>
    %131 = arith.addf %130, %129 : vector<16x128xf32>
    %132 = arith.divf %130, %131 : vector<16x128xf32>
    %133 = vector.extract_strided_slice %124 {offsets = [0, 128], sizes = [16, 128], strides = [1, 1]} : vector<16x384xf32> to vector<16x128xf32>
    %134 = vector.extract_strided_slice %122 {offsets = [0, 128], sizes = [16, 128], strides = [1, 1]} : vector<16x384xf32> to vector<16x128xf32>
    %135 = arith.addf %133, %134 : vector<16x128xf32>
    %136 = arith.negf %135 : vector<16x128xf32>
    %137 = math.exp %136 : vector<16x128xf32>
    %cst_27 = arith.constant 1.000000e+00 : f32
    %138 = vector.broadcast %cst_27 : f32 to vector<16x128xf32>
    %139 = arith.addf %138, %137 : vector<16x128xf32>
    %140 = arith.divf %138, %139 : vector<16x128xf32>
    %141 = vector.extract_strided_slice %124 {offsets = [0, 256], sizes = [16, 128], strides = [1, 1]} : vector<16x384xf32> to vector<16x128xf32>
    %142 = vector.extract_strided_slice %122 {offsets = [0, 256], sizes = [16, 128], strides = [1, 1]} : vector<16x384xf32> to vector<16x128xf32>
    %143 = arith.addf %142, %11 : vector<16x128xf32>
    %144 = arith.mulf %132, %143 : vector<16x128xf32>
    %145 = arith.addf %141, %144 : vector<16x128xf32>
    %146 = math.tanh %145 : vector<16x128xf32>
    %c3_i32 = arith.constant 3 : i32
    %147 = vector.broadcast %c3_i32 : i32 to vector<16x1xi32>
    %148 = arith.cmpi sgt, %12, %147 : vector<16x1xi32>
    %149 = arith.extui %148 : vector<16x1xi1> to vector<16x1xi32>
    %150 = arith.sitofp %149 : vector<16x1xi32> to vector<16x1xf32>
    %cst_28 = arith.constant 1.000000e+00 : f32
    %151 = vector.broadcast %cst_28 : f32 to vector<16x128xf32>
    %152 = arith.subf %151, %140 : vector<16x128xf32>
    %153 = vector.broadcast %150 : vector<16x1xf32> to vector<16x128xf32>
    %154 = arith.mulf %153, %152 : vector<16x128xf32>
    %155 = arith.subf %146, %121 : vector<16x128xf32>
    %156 = arith.mulf %154, %155 : vector<16x128xf32>
    %157 = arith.addf %121, %156 : vector<16x128xf32>
    %cst_29 = arith.constant dense<0.000000e+00> : vector<16x384xf32>
    %158 = tpu.matmul %157, %8, %cst_29 {dimension_numbers = #tpu.dot_dimension_numbers<[1], [0], [0], [1], [0, 0, 1, 1], [], []>} : vector<16x128xf32>, vector<128x384xf32>, vector<16x384xf32> -> vector<16x384xf32>
    %159 = vector.extract_strided_slice %7 {offsets = [4, 0, 0], sizes = [1, 16, 384], strides = [1, 1, 1]} : vector<8x16x384xf32> to vector<1x16x384xf32>
    %160 = vector.shape_cast %159 : vector<1x16x384xf32> to vector<16x384xf32>
    %161 = vector.extract_strided_slice %160 {offsets = [0, 0], sizes = [16, 128], strides = [1, 1]} : vector<16x384xf32> to vector<16x128xf32>
    %162 = vector.extract_strided_slice %158 {offsets = [0, 0], sizes = [16, 128], strides = [1, 1]} : vector<16x384xf32> to vector<16x128xf32>
    %163 = arith.addf %161, %162 : vector<16x128xf32>
    %164 = arith.negf %163 : vector<16x128xf32>
    %165 = math.exp %164 : vector<16x128xf32>
    %cst_30 = arith.constant 1.000000e+00 : f32
    %166 = vector.broadcast %cst_30 : f32 to vector<16x128xf32>
    %167 = arith.addf %166, %165 : vector<16x128xf32>
    %168 = arith.divf %166, %167 : vector<16x128xf32>
    %169 = vector.extract_strided_slice %160 {offsets = [0, 128], sizes = [16, 128], strides = [1, 1]} : vector<16x384xf32> to vector<16x128xf32>
    %170 = vector.extract_strided_slice %158 {offsets = [0, 128], sizes = [16, 128], strides = [1, 1]} : vector<16x384xf32> to vector<16x128xf32>
    %171 = arith.addf %169, %170 : vector<16x128xf32>
    %172 = arith.negf %171 : vector<16x128xf32>
    %173 = math.exp %172 : vector<16x128xf32>
    %cst_31 = arith.constant 1.000000e+00 : f32
    %174 = vector.broadcast %cst_31 : f32 to vector<16x128xf32>
    %175 = arith.addf %174, %173 : vector<16x128xf32>
    %176 = arith.divf %174, %175 : vector<16x128xf32>
    %177 = vector.extract_strided_slice %160 {offsets = [0, 256], sizes = [16, 128], strides = [1, 1]} : vector<16x384xf32> to vector<16x128xf32>
    %178 = vector.extract_strided_slice %158 {offsets = [0, 256], sizes = [16, 128], strides = [1, 1]} : vector<16x384xf32> to vector<16x128xf32>
    %179 = arith.addf %178, %11 : vector<16x128xf32>
    %180 = arith.mulf %168, %179 : vector<16x128xf32>
    %181 = arith.addf %177, %180 : vector<16x128xf32>
    %182 = math.tanh %181 : vector<16x128xf32>
    %c4_i32 = arith.constant 4 : i32
    %183 = vector.broadcast %c4_i32 : i32 to vector<16x1xi32>
    %184 = arith.cmpi sgt, %12, %183 : vector<16x1xi32>
    %185 = arith.extui %184 : vector<16x1xi1> to vector<16x1xi32>
    %186 = arith.sitofp %185 : vector<16x1xi32> to vector<16x1xf32>
    %cst_32 = arith.constant 1.000000e+00 : f32
    %187 = vector.broadcast %cst_32 : f32 to vector<16x128xf32>
    %188 = arith.subf %187, %176 : vector<16x128xf32>
    %189 = vector.broadcast %186 : vector<16x1xf32> to vector<16x128xf32>
    %190 = arith.mulf %189, %188 : vector<16x128xf32>
    %191 = arith.subf %182, %157 : vector<16x128xf32>
    %192 = arith.mulf %190, %191 : vector<16x128xf32>
    %193 = arith.addf %157, %192 : vector<16x128xf32>
    %cst_33 = arith.constant dense<0.000000e+00> : vector<16x384xf32>
    %194 = tpu.matmul %193, %8, %cst_33 {dimension_numbers = #tpu.dot_dimension_numbers<[1], [0], [0], [1], [0, 0, 1, 1], [], []>} : vector<16x128xf32>, vector<128x384xf32>, vector<16x384xf32> -> vector<16x384xf32>
    %195 = vector.extract_strided_slice %7 {offsets = [5, 0, 0], sizes = [1, 16, 384], strides = [1, 1, 1]} : vector<8x16x384xf32> to vector<1x16x384xf32>
    %196 = vector.shape_cast %195 : vector<1x16x384xf32> to vector<16x384xf32>
    %197 = vector.extract_strided_slice %196 {offsets = [0, 0], sizes = [16, 128], strides = [1, 1]} : vector<16x384xf32> to vector<16x128xf32>
    %198 = vector.extract_strided_slice %194 {offsets = [0, 0], sizes = [16, 128], strides = [1, 1]} : vector<16x384xf32> to vector<16x128xf32>
    %199 = arith.addf %197, %198 : vector<16x128xf32>
    %200 = arith.negf %199 : vector<16x128xf32>
    %201 = math.exp %200 : vector<16x128xf32>
    %cst_34 = arith.constant 1.000000e+00 : f32
    %202 = vector.broadcast %cst_34 : f32 to vector<16x128xf32>
    %203 = arith.addf %202, %201 : vector<16x128xf32>
    %204 = arith.divf %202, %203 : vector<16x128xf32>
    %205 = vector.extract_strided_slice %196 {offsets = [0, 128], sizes = [16, 128], strides = [1, 1]} : vector<16x384xf32> to vector<16x128xf32>
    %206 = vector.extract_strided_slice %194 {offsets = [0, 128], sizes = [16, 128], strides = [1, 1]} : vector<16x384xf32> to vector<16x128xf32>
    %207 = arith.addf %205, %206 : vector<16x128xf32>
    %208 = arith.negf %207 : vector<16x128xf32>
    %209 = math.exp %208 : vector<16x128xf32>
    %cst_35 = arith.constant 1.000000e+00 : f32
    %210 = vector.broadcast %cst_35 : f32 to vector<16x128xf32>
    %211 = arith.addf %210, %209 : vector<16x128xf32>
    %212 = arith.divf %210, %211 : vector<16x128xf32>
    %213 = vector.extract_strided_slice %196 {offsets = [0, 256], sizes = [16, 128], strides = [1, 1]} : vector<16x384xf32> to vector<16x128xf32>
    %214 = vector.extract_strided_slice %194 {offsets = [0, 256], sizes = [16, 128], strides = [1, 1]} : vector<16x384xf32> to vector<16x128xf32>
    %215 = arith.addf %214, %11 : vector<16x128xf32>
    %216 = arith.mulf %204, %215 : vector<16x128xf32>
    %217 = arith.addf %213, %216 : vector<16x128xf32>
    %218 = math.tanh %217 : vector<16x128xf32>
    %c5_i32 = arith.constant 5 : i32
    %219 = vector.broadcast %c5_i32 : i32 to vector<16x1xi32>
    %220 = arith.cmpi sgt, %12, %219 : vector<16x1xi32>
    %221 = arith.extui %220 : vector<16x1xi1> to vector<16x1xi32>
    %222 = arith.sitofp %221 : vector<16x1xi32> to vector<16x1xf32>
    %cst_36 = arith.constant 1.000000e+00 : f32
    %223 = vector.broadcast %cst_36 : f32 to vector<16x128xf32>
    %224 = arith.subf %223, %212 : vector<16x128xf32>
    %225 = vector.broadcast %222 : vector<16x1xf32> to vector<16x128xf32>
    %226 = arith.mulf %225, %224 : vector<16x128xf32>
    %227 = arith.subf %218, %193 : vector<16x128xf32>
    %228 = arith.mulf %226, %227 : vector<16x128xf32>
    %229 = arith.addf %193, %228 : vector<16x128xf32>
    %cst_37 = arith.constant dense<0.000000e+00> : vector<16x384xf32>
    %230 = tpu.matmul %229, %8, %cst_37 {dimension_numbers = #tpu.dot_dimension_numbers<[1], [0], [0], [1], [0, 0, 1, 1], [], []>} : vector<16x128xf32>, vector<128x384xf32>, vector<16x384xf32> -> vector<16x384xf32>
    %231 = vector.extract_strided_slice %7 {offsets = [6, 0, 0], sizes = [1, 16, 384], strides = [1, 1, 1]} : vector<8x16x384xf32> to vector<1x16x384xf32>
    %232 = vector.shape_cast %231 : vector<1x16x384xf32> to vector<16x384xf32>
    %233 = vector.extract_strided_slice %232 {offsets = [0, 0], sizes = [16, 128], strides = [1, 1]} : vector<16x384xf32> to vector<16x128xf32>
    %234 = vector.extract_strided_slice %230 {offsets = [0, 0], sizes = [16, 128], strides = [1, 1]} : vector<16x384xf32> to vector<16x128xf32>
    %235 = arith.addf %233, %234 : vector<16x128xf32>
    %236 = arith.negf %235 : vector<16x128xf32>
    %237 = math.exp %236 : vector<16x128xf32>
    %cst_38 = arith.constant 1.000000e+00 : f32
    %238 = vector.broadcast %cst_38 : f32 to vector<16x128xf32>
    %239 = arith.addf %238, %237 : vector<16x128xf32>
    %240 = arith.divf %238, %239 : vector<16x128xf32>
    %241 = vector.extract_strided_slice %232 {offsets = [0, 128], sizes = [16, 128], strides = [1, 1]} : vector<16x384xf32> to vector<16x128xf32>
    %242 = vector.extract_strided_slice %230 {offsets = [0, 128], sizes = [16, 128], strides = [1, 1]} : vector<16x384xf32> to vector<16x128xf32>
    %243 = arith.addf %241, %242 : vector<16x128xf32>
    %244 = arith.negf %243 : vector<16x128xf32>
    %245 = math.exp %244 : vector<16x128xf32>
    %cst_39 = arith.constant 1.000000e+00 : f32
    %246 = vector.broadcast %cst_39 : f32 to vector<16x128xf32>
    %247 = arith.addf %246, %245 : vector<16x128xf32>
    %248 = arith.divf %246, %247 : vector<16x128xf32>
    %249 = vector.extract_strided_slice %232 {offsets = [0, 256], sizes = [16, 128], strides = [1, 1]} : vector<16x384xf32> to vector<16x128xf32>
    %250 = vector.extract_strided_slice %230 {offsets = [0, 256], sizes = [16, 128], strides = [1, 1]} : vector<16x384xf32> to vector<16x128xf32>
    %251 = arith.addf %250, %11 : vector<16x128xf32>
    %252 = arith.mulf %240, %251 : vector<16x128xf32>
    %253 = arith.addf %249, %252 : vector<16x128xf32>
    %254 = math.tanh %253 : vector<16x128xf32>
    %c6_i32 = arith.constant 6 : i32
    %255 = vector.broadcast %c6_i32 : i32 to vector<16x1xi32>
    %256 = arith.cmpi sgt, %12, %255 : vector<16x1xi32>
    %257 = arith.extui %256 : vector<16x1xi1> to vector<16x1xi32>
    %258 = arith.sitofp %257 : vector<16x1xi32> to vector<16x1xf32>
    %cst_40 = arith.constant 1.000000e+00 : f32
    %259 = vector.broadcast %cst_40 : f32 to vector<16x128xf32>
    %260 = arith.subf %259, %248 : vector<16x128xf32>
    %261 = vector.broadcast %258 : vector<16x1xf32> to vector<16x128xf32>
    %262 = arith.mulf %261, %260 : vector<16x128xf32>
    %263 = arith.subf %254, %229 : vector<16x128xf32>
    %264 = arith.mulf %262, %263 : vector<16x128xf32>
    %265 = arith.addf %229, %264 : vector<16x128xf32>
    %cst_41 = arith.constant dense<0.000000e+00> : vector<16x384xf32>
    %266 = tpu.matmul %265, %8, %cst_41 {dimension_numbers = #tpu.dot_dimension_numbers<[1], [0], [0], [1], [0, 0, 1, 1], [], []>} : vector<16x128xf32>, vector<128x384xf32>, vector<16x384xf32> -> vector<16x384xf32>
    %267 = vector.extract_strided_slice %7 {offsets = [7, 0, 0], sizes = [1, 16, 384], strides = [1, 1, 1]} : vector<8x16x384xf32> to vector<1x16x384xf32>
    %268 = vector.shape_cast %267 : vector<1x16x384xf32> to vector<16x384xf32>
    %269 = vector.extract_strided_slice %268 {offsets = [0, 0], sizes = [16, 128], strides = [1, 1]} : vector<16x384xf32> to vector<16x128xf32>
    %270 = vector.extract_strided_slice %266 {offsets = [0, 0], sizes = [16, 128], strides = [1, 1]} : vector<16x384xf32> to vector<16x128xf32>
    %271 = arith.addf %269, %270 : vector<16x128xf32>
    %272 = arith.negf %271 : vector<16x128xf32>
    %273 = math.exp %272 : vector<16x128xf32>
    %cst_42 = arith.constant 1.000000e+00 : f32
    %274 = vector.broadcast %cst_42 : f32 to vector<16x128xf32>
    %275 = arith.addf %274, %273 : vector<16x128xf32>
    %276 = arith.divf %274, %275 : vector<16x128xf32>
    %277 = vector.extract_strided_slice %268 {offsets = [0, 128], sizes = [16, 128], strides = [1, 1]} : vector<16x384xf32> to vector<16x128xf32>
    %278 = vector.extract_strided_slice %266 {offsets = [0, 128], sizes = [16, 128], strides = [1, 1]} : vector<16x384xf32> to vector<16x128xf32>
    %279 = arith.addf %277, %278 : vector<16x128xf32>
    %280 = arith.negf %279 : vector<16x128xf32>
    %281 = math.exp %280 : vector<16x128xf32>
    %cst_43 = arith.constant 1.000000e+00 : f32
    %282 = vector.broadcast %cst_43 : f32 to vector<16x128xf32>
    %283 = arith.addf %282, %281 : vector<16x128xf32>
    %284 = arith.divf %282, %283 : vector<16x128xf32>
    %285 = vector.extract_strided_slice %268 {offsets = [0, 256], sizes = [16, 128], strides = [1, 1]} : vector<16x384xf32> to vector<16x128xf32>
    %286 = vector.extract_strided_slice %266 {offsets = [0, 256], sizes = [16, 128], strides = [1, 1]} : vector<16x384xf32> to vector<16x128xf32>
    %287 = arith.addf %286, %11 : vector<16x128xf32>
    %288 = arith.mulf %276, %287 : vector<16x128xf32>
    %289 = arith.addf %285, %288 : vector<16x128xf32>
    %290 = math.tanh %289 : vector<16x128xf32>
    %c7_i32 = arith.constant 7 : i32
    %291 = vector.broadcast %c7_i32 : i32 to vector<16x1xi32>
    %292 = arith.cmpi sgt, %12, %291 : vector<16x1xi32>
    %293 = arith.extui %292 : vector<16x1xi1> to vector<16x1xi32>
    %294 = arith.sitofp %293 : vector<16x1xi32> to vector<16x1xf32>
    %cst_44 = arith.constant 1.000000e+00 : f32
    %295 = vector.broadcast %cst_44 : f32 to vector<16x128xf32>
    %296 = arith.subf %295, %284 : vector<16x128xf32>
    %297 = vector.broadcast %294 : vector<16x1xf32> to vector<16x128xf32>
    %298 = arith.mulf %297, %296 : vector<16x128xf32>
    %299 = arith.subf %290, %265 : vector<16x128xf32>
    %300 = arith.mulf %298, %299 : vector<16x128xf32>
    %301 = arith.addf %265, %300 : vector<16x128xf32>
    %302 = vector.extract_strided_slice %301 {offsets = [0, 0], sizes = [8, 128], strides = [1, 1]} : vector<16x128xf32> to vector<8x128xf32>
    %303 = vector.extract_strided_slice %301 {offsets = [8, 0], sizes = [8, 128], strides = [1, 1]} : vector<16x128xf32> to vector<8x128xf32>
    %c0_45 = arith.constant 0 : index
    %c0_46 = arith.constant 0 : index
    %304 = vector.load %arg7[%c0_45, %c0_46] : memref<128x2xf32, #tpu.memory_space<vmem>>, vector<128x2xf32>
    %cst_47 = arith.constant dense<0.000000e+00> : vector<8x2xf32>
    %305 = tpu.matmul %302, %304, %cst_47 {dimension_numbers = #tpu.dot_dimension_numbers<[1], [0], [0], [1], [0, 0, 1, 1], [], []>} : vector<8x128xf32>, vector<128x2xf32>, vector<8x2xf32> -> vector<8x2xf32>
    %c0_48 = arith.constant 0 : index
    %c0_49 = arith.constant 0 : index
    %306 = vector.load %arg8[%c0_48, %c0_49] : memref<128x2xf32, #tpu.memory_space<vmem>>, vector<128x2xf32>
    %cst_50 = arith.constant dense<0.000000e+00> : vector<8x2xf32>
    %307 = tpu.matmul %303, %306, %cst_50 {dimension_numbers = #tpu.dot_dimension_numbers<[1], [0], [0], [1], [0, 0, 1, 1], [], []>} : vector<8x128xf32>, vector<128x2xf32>, vector<8x2xf32> -> vector<8x2xf32>
    %308 = arith.addf %305, %307 : vector<8x2xf32>
    %c0_51 = arith.constant 0 : index
    %c0_52 = arith.constant 0 : index
    %309 = vector.load %arg9[%c0_51, %c0_52] : memref<1x2xf32, #tpu.memory_space<vmem>>, vector<1x2xf32>
    %310 = vector.broadcast %309 : vector<1x2xf32> to vector<8x2xf32>
    %311 = arith.addf %308, %310 : vector<8x2xf32>
    %cst_53 = arith.constant dense<0xFF800000> : vector<8xf32>
    %312 = vector.multi_reduction <maximumf>, %311, %cst_53 [1] : vector<8x2xf32> to vector<8xf32>
    %cst_54 = arith.constant 0xFF800000 : f32
    %313 = vector.broadcast %cst_54 : f32 to vector<8xf32>
    %314 = arith.maximumf %313, %312 : vector<8xf32>
    %315 = vector.shape_cast %314 : vector<8xf32> to vector<8x1xf32>
    %316 = vector.broadcast %315 : vector<8x1xf32> to vector<8x2xf32>
    %317 = arith.subf %311, %316 : vector<8x2xf32>
    %318 = math.exp %317 : vector<8x2xf32>
    %cst_55 = arith.constant dense<0.000000e+00> : vector<8xf32>
    %319 = vector.multi_reduction <add>, %318, %cst_55 [1] : vector<8x2xf32> to vector<8xf32>
    %320 = vector.shape_cast %319 : vector<8xf32> to vector<8x1xf32>
    %321 = vector.broadcast %320 : vector<8x1xf32> to vector<8x2xf32>
    %322 = arith.divf %318, %321 : vector<8x2xf32>
    %c0_56 = arith.constant 0 : index
    %c0_57 = arith.constant 0 : index
    %323 = vector.load %arg10[%c0_56, %c0_57] : memref<8x2xf32, #tpu.memory_space<vmem>>, vector<8x2xf32>
    tpu.vector_store %arg10[%c0_56, %c0_57], %322 {strides = array<i32>} : memref<8x2xf32, #tpu.memory_space<vmem>>, vector<8x2xf32>,
    return
  }
  func.func @transform_0(%arg0: i32) -> (i32, i32, i32) {
    %c0_i32 = arith.constant 0 : i32
    %c0_i32_0 = arith.constant 0 : i32
    %c0_i32_1 = arith.constant 0 : i32
    return %c0_i32, %arg0, %c0_i32_0 : i32, i32, i32
  }
  func.func @transform_1(%arg0: i32) -> (i32, i32) {
    %c0_i32 = arith.constant 0 : i32
    %c0_i32_0 = arith.constant 0 : i32
    return %arg0, %c0_i32 : i32, i32
  }
  func.func @transform_2(%arg0: i32) -> (i32, i32) {
    %c0_i32 = arith.constant 0 : i32
    %c0_i32_0 = arith.constant 0 : i32
    %c0_i32_1 = arith.constant 0 : i32
    return %c0_i32, %c0_i32_0 : i32, i32
  }
  func.func @transform_3(%arg0: i32) -> (i32, i32) {
    %c0_i32 = arith.constant 0 : i32
    %c0_i32_0 = arith.constant 0 : i32
    %c0_i32_1 = arith.constant 0 : i32
    return %c0_i32, %c0_i32_0 : i32, i32
  }
  func.func @transform_4(%arg0: i32) -> (i32, i32) {
    %c0_i32 = arith.constant 0 : i32
    %c0_i32_0 = arith.constant 0 : i32
    %c0_i32_1 = arith.constant 0 : i32
    return %c0_i32, %c0_i32_0 : i32, i32
  }
  func.func @transform_5(%arg0: i32) -> (i32, i32) {
    %c0_i32 = arith.constant 0 : i32
    %c0_i32_0 = arith.constant 0 : i32
    %c0_i32_1 = arith.constant 0 : i32
    return %c0_i32, %c0_i32_0 : i32, i32
  }
  func.func @transform_6(%arg0: i32) -> (i32, i32) {
    %c0_i32 = arith.constant 0 : i32
    %c0_i32_0 = arith.constant 0 : i32
    %c0_i32_1 = arith.constant 0 : i32
    return %c0_i32, %c0_i32_0 : i32, i32
  }
  func.func @transform_7(%arg0: i32) -> (i32, i32) {
    %c0_i32 = arith.constant 0 : i32
    %c0_i32_0 = arith.constant 0 : i32
    %c0_i32_1 = arith.constant 0 : i32
    return %c0_i32, %c0_i32_0 : i32, i32
  }
  func.func @transform_8(%arg0: i32) -> (i32, i32) {
    %c0_i32 = arith.constant 0 : i32
    %c0_i32_0 = arith.constant 0 : i32
    %c0_i32_1 = arith.constant 0 : i32
    return %c0_i32, %c0_i32_0 : i32, i32
  }
  func.func @transform_9(%arg0: i32) -> (i32, i32) {
    %c0_i32 = arith.constant 0 : i32
    %c0_i32_0 = arith.constant 0 : i32
    return %arg0, %c0_i32 : i32, i32
  }
}

</mosaic_0001>

<llo_original>
// kernel: rnn_pair_classify.1
$region0: #{rnn_pair_classify.1}
  #allocation0 [shape = 'u32[]', space=smem, size = 0x4, offset = 0x4, fixed_abs, tag = 'smem constant byte address 0x4 - core index']
  #allocation1 [shape = 'u32[144,128]{1,0:T(1,128)}', space=vmem, size = 0x12000, scoped, tag = 'internal scratch']
  %s0 = inlined_call_operand.vmem [shape: f32[8,16,128], index: 0, kind: input, shape index: {}]
  %s1 = inlined_call_operand.vmem [shape: s32[16,1], index: 1, kind: input, shape index: {}]
  %s2 = inlined_call_operand.vmem [shape: f32[128,384], index: 2, kind: input, shape index: {}]
  %s3 = inlined_call_operand.vmem [shape: f32[128,384], index: 3, kind: input, shape index: {}]
  %s4 = inlined_call_operand.vmem [shape: f32[1,384], index: 4, kind: input, shape index: {}]
  %s5 = inlined_call_operand.vmem [shape: f32[1,128], index: 5, kind: input, shape index: {}]
  %s6 = inlined_call_operand.vmem [shape: f32[128,2], index: 6, kind: input, shape index: {}]
  %s7 = inlined_call_operand.vmem [shape: f32[128,2], index: 7, kind: input, shape index: {}]
  %s8 = inlined_call_operand.vmem [shape: f32[1,2], index: 8, kind: input, shape index: {}]
  %s9 = inlined_call_operand.vmem [shape: f32[8,2], index: 9, kind: output, shape index: {}]
  %s10 = sld [smem:[#allocation0]]
  $region46: #{rnn_pair_classify.1} parent=0
    _
  %s12 = ssub.s32 1, %s10
  %s13 = scalar_select 0, %s12, %s10
  // Predicated region
  $region2: #{rnn_pair_classify.1} parent=0 // pred_check
    _
  $region3: #{rnn_pair_classify.1} parent=0 // pred_check_branch
    %15 = sbr.rel (0) target = $region5
  $region4: #{rnn_pair_classify.1} parent=0 // pred_region
    _
  $region5: #{rnn_pair_classify.1} parent=0 // pred_fallthru
    _
  // Predicated region
  $region6: #{rnn_pair_classify.1} parent=0 // pred_check
    _
  $region7: #{rnn_pair_classify.1} parent=0 // pred_check_branch
    %17 = sbr.rel (0) target = $region9
  $region8: #{rnn_pair_classify.1} parent=0 // pred_region
    _
  $region9: #{rnn_pair_classify.1} parent=0 // pred_fallthru
    _
  // Predicated region
  $region10: #{rnn_pair_classify.1} parent=0 // pred_check
    _
  $region11: #{rnn_pair_classify.1} parent=0 // pred_check_branch
    %19 = sbr.rel (0) target = $region13
  $region12: #{rnn_pair_classify.1} parent=0 // pred_region
    _
  $region13: #{rnn_pair_classify.1} parent=0 // pred_fallthru
    _
  // Predicated region
  $region14: #{rnn_pair_classify.1} parent=0 // pred_check
    _
  $region15: #{rnn_pair_classify.1} parent=0 // pred_check_branch
    %21 = sbr.rel (0) target = $region17
  $region16: #{rnn_pair_classify.1} parent=0 // pred_region
    _
  $region17: #{rnn_pair_classify.1} parent=0 // pred_fallthru
    _
  // Predicated region
  $region18: #{rnn_pair_classify.1} parent=0 // pred_check
    _
  $region19: #{rnn_pair_classify.1} parent=0 // pred_check_branch
    %23 = sbr.rel (0) target = $region21
  $region20: #{rnn_pair_classify.1} parent=0 // pred_region
    _
  $region21: #{rnn_pair_classify.1} parent=0 // pred_fallthru
    _
  // Predicated region
  $region22: #{rnn_pair_classify.1} parent=0 // pred_check
    _
  $region23: #{rnn_pair_classify.1} parent=0 // pred_check_branch
    %25 = sbr.rel (0) target = $region25
  $region24: #{rnn_pair_classify.1} parent=0 // pred_region
    _
  $region25: #{rnn_pair_classify.1} parent=0 // pred_fallthru
    _
  // Predicated region
  $region26: #{rnn_pair_classify.1} parent=0 // pred_check
    _
  $region27: #{rnn_pair_classify.1} parent=0 // pred_check_branch
    %27 = sbr.rel (0) target = $region29
  $region28: #{rnn_pair_classify.1} parent=0 // pred_region
    _
  $region29: #{rnn_pair_classify.1} parent=0 // pred_fallthru
    _
  // Predicated region
  $region30: #{rnn_pair_classify.1} parent=0 // pred_check
    _
  $region31: #{rnn_pair_classify.1} parent=0 // pred_check_branch
    %29 = sbr.rel (0) target = $region33
  $region32: #{rnn_pair_classify.1} parent=0 // pred_region
    _
  $region33: #{rnn_pair_classify.1} parent=0 // pred_fallthru
    _
  // Predicated region
  $region34: #{rnn_pair_classify.1} parent=0 // pred_check
    _
  $region35: #{rnn_pair_classify.1} parent=0 // pred_check_branch
    %31 = sbr.rel (0) target = $region37
  $region36: #{rnn_pair_classify.1} parent=0 // pred_region
    _
  $region37: #{rnn_pair_classify.1} parent=0 // pred_fallthru
    _
  %v32 = vld [vmem:[%s0] sm:$0xff]
  %v33 = vld [vmem:[%s0 + $0x8] sm:$0xff]
  %v34 = vld [vmem:[%s0 + $0x10] sm:$0xff]
  %v35 = vld [vmem:[%s0 + $0x18] sm:$0xff]
  %v36 = vld [vmem:[%s0 + $0x20] sm:$0xff]
  %v37 = vld [vmem:[%s0 + $0x28] sm:$0xff]
  %v38 = vld [vmem:[%s0 + $0x30] sm:$0xff]
  %v39 = vld [vmem:[%s0 + $0x38] sm:$0xff]
  %v40 = vld [vmem:[%s0 + $0x40] sm:$0xff]
  %v41 = vld [vmem:[%s0 + $0x48] sm:$0xff]
  %v42 = vld [vmem:[%s0 + $0x50] sm:$0xff]
  %v43 = vld [vmem:[%s0 + $0x58] sm:$0xff]
  %v44 = vld [vmem:[%s0 + $0x60] sm:$0xff]
  %v45 = vld [vmem:[%s0 + $0x68] sm:$0xff]
  %v46 = vld [vmem:[%s0 + $0x70] sm:$0xff]
  %v47 = vld [vmem:[%s0 + $0x78] sm:$0xff]
  %v48 = vld [vmem:[%s2] sm:$0xff]
  %v49 = vld [vmem:[%s2 + $0x8] sm:$0xff]
  %v50 = vld [vmem:[%s2 + $0x10] sm:$0xff]
  %v51 = vld [vmem:[%s2 + $0x18] sm:$0xff]
  %v52 = vld [vmem:[%s2 + $0x20] sm:$0xff]
  %v53 = vld [vmem:[%s2 + $0x28] sm:$0xff]
  %v54 = vld [vmem:[%s2 + $0x30] sm:$0xff]
  %v55 = vld [vmem:[%s2 + $0x38] sm:$0xff]
  %v56 = vld [vmem:[%s2 + $0x40] sm:$0xff]
  %v57 = vld [vmem:[%s2 + $0x48] sm:$0xff]
  %v58 = vld [vmem:[%s2 + $0x50] sm:$0xff]
  %v59 = vld [vmem:[%s2 + $0x58] sm:$0xff]
  %v60 = vld [vmem:[%s2 + $0x60] sm:$0xff]
  %v61 = vld [vmem:[%s2 + $0x68] sm:$0xff]
  %v62 = vld [vmem:[%s2 + $0x70] sm:$0xff]
  %v63 = vld [vmem:[%s2 + $0x78] sm:$0xff]
  %v64 = vld [vmem:[%s2 + $0x80] sm:$0xff]
  %v65 = vld [vmem:[%s2 + $0x88] sm:$0xff]
  %v66 = vld [vmem:[%s2 + $0x90] sm:$0xff]
  %v67 = vld [vmem:[%s2 + $0x98] sm:$0xff]
  %v68 = vld [vmem:[%s2 + $0xa0] sm:$0xff]
  %v69 = vld [vmem:[%s2 + $0xa8] sm:$0xff]
  %v70 = vld [vmem:[%s2 + $0xb0] sm:$0xff]
  %v71 = vld [vmem:[%s2 + $0xb8] sm:$0xff]
  %v72 = vld [vmem:[%s2 + $0xc0] sm:$0xff]
  %v73 = vld [vmem:[%s2 + $0xc8] sm:$0xff]
  %v74 = vld [vmem:[%s2 + $0xd0] sm:$0xff]
  %v75 = vld [vmem:[%s2 + $0xd8] sm:$0xff]
  %v76 = vld [vmem:[%s2 + $0xe0] sm:$0xff]
  %v77 = vld [vmem:[%s2 + $0xe8] sm:$0xff]
  %v78 = vld [vmem:[%s2 + $0xf0] sm:$0xff]
  %v79 = vld [vmem:[%s2 + $0xf8] sm:$0xff]
  %v80 = vld [vmem:[%s2 + $0x100] sm:$0xff]
  %v81 = vld [vmem:[%s2 + $0x108] sm:$0xff]
  %v82 = vld [vmem:[%s2 + $0x110] sm:$0xff]
  %v83 = vld [vmem:[%s2 + $0x118] sm:$0xff]
  %v84 = vld [vmem:[%s2 + $0x120] sm:$0xff]
  %v85 = vld [vmem:[%s2 + $0x128] sm:$0xff]
  %v86 = vld [vmem:[%s2 + $0x130] sm:$0xff]
  %v87 = vld [vmem:[%s2 + $0x138] sm:$0xff]
  %v88 = vld [vmem:[%s2 + $0x140] sm:$0xff]
  %v89 = vld [vmem:[%s2 + $0x148] sm:$0xff]
  %v90 = vld [vmem:[%s2 + $0x150] sm:$0xff]
  %v91 = vld [vmem:[%s2 + $0x158] sm:$0xff]
  %v92 = vld [vmem:[%s2 + $0x160] sm:$0xff]
  %v93 = vld [vmem:[%s2 + $0x168] sm:$0xff]
  %v94 = vld [vmem:[%s2 + $0x170] sm:$0xff]
  %v95 = vld [vmem:[%s2 + $0x178] sm:$0xff]
  %v96 = vld [vmem:[%s4] sm:$0x7]
  %v98 = vlaneseq
  %v99 = vshrl.u32 %v98, 7
  %v100 = vsub.s32 0, %v99
  %v101 = vrot.slane %v96, %v100
  %v102 = vlaneseq
  %v103 = vshrl.u32 %v102, 7
  %v104 = vsub.s32 1, %v103
  %v105 = vrot.slane %v96, %v104
  %v106 = vlaneseq
  %v107 = vshrl.u32 %v106, 7
  %v108 = vsub.s32 2, %v107
  %v109 = vrot.slane %v96, %v108
  %113 = vmatprep.subr.mxu0 %v94
  %114 = vmatpush1.msra.mxu0 %v93
  %115 = vmatprep.subr.mxu0 %v91
  %116 = vmatpush1.msra.mxu0 %v90
  %117 = vmatprep.subr.mxu0 %v88
  %118 = vmatpush1.msra.mxu0 %v87
  %119 = vmatprep.subr.mxu0 %v85
  %120 = vmatpush1.msra.mxu0 %v84
  %121 = vmatprep.subr.mxu0 %v82
  %122 = vmatpush1.msra.mxu0 %v81
  %123 = vmatprep.subr.mxu0 %v79
  %124 = vmatpush1.msra.mxu0 %v78
  %125 = vmatprep.subr.mxu0 %v76
  %126 = vmatpush1.msra.mxu0 %v75
  %127 = vmatprep.subr.mxu0 %v73
  %128 = vmatpush1.msra.mxu0 %v72
  %129 = vmatprep.subr.mxu0 %v70
  %130 = vmatpush1.msra.mxu0 %v69
  %131 = vmatprep.subr.mxu0 %v67
  %132 = vmatpush1.msra.mxu0 %v66
  %133 = vmatprep.subr.mxu0 %v64
  %134 = vmatpush1.msra.mxu0 %v63
  %135 = vmatprep.subr.mxu0 %v61
  %136 = vmatpush1.msra.mxu0 %v60
  %137 = vmatprep.subr.mxu0 %v58
  %138 = vmatpush1.msra.mxu0 %v57
  %139 = vmatprep.subr.mxu0 %v55
  %140 = vmatpush1.msra.mxu0 %v54
  %141 = vmatprep.subr.mxu0 %v52
  %142 = vmatpush1.msra.mxu0 %v51
  %143 = vmatprep.subr.mxu0 %v49
  %144 = vmatpush1.msra.mxu0 %v48
  %145 = vmatprep.subr.mxu0 0.0
  %146 = vmatpush2.msra.mxu0 0.0
  %147 = vmatprep.subr.mxu0 0.0
  %148 = vmatpush2.msra.mxu0 0.0
  %149 = vmatprep.subr.mxu0 0.0
  %150 = vmatpush2.msra.mxu0 0.0
  %151 = vmatprep.subr.mxu0 0.0
  %152 = vmatpush2.msra.mxu0 0.0
  %153 = vmatprep.subr.mxu0 0.0
  %154 = vmatpush2.msra.mxu0 0.0
  %155 = vmatprep.subr.mxu0 0.0
  %156 = vmatpush2.msra.mxu0 0.0
  %157 = vmatprep.subr.mxu0 0.0
  %158 = vmatpush2.msra.mxu0 0.0
  %159 = vmatprep.subr.mxu0 0.0
  %160 = vmatpush2.msra.mxu0 0.0
  %161 = vmatprep.subr.mxu0 0.0
  %162 = vmatpush2.msra.mxu0 0.0
  %163 = vmatprep.subr.mxu0 0.0
  %164 = vmatpush2.msra.mxu0 0.0
  %165 = vmatprep.subr.mxu0 0.0
  %166 = vmatpush2.msra.mxu0 0.0
  %167 = vmatprep.subr.mxu0 0.0
  %168 = vmatpush2.msra.mxu0 0.0
  %169 = vmatprep.subr.mxu0 0.0
  %170 = vmatpush2.msra.mxu0 0.0
  %171 = vmatprep.subr.mxu0 0.0
  %172 = vmatpush2.msra.mxu0 0.0
  %173 = vmatprep.subr.mxu0 0.0
  %174 = vmatpush2.msra.mxu0 0.0
  %175 = vmatprep.subr.mxu0 0.0
  %176 = vmatpush2.msra.mxu0 0.0
  %177 = vmatprep.mubr.f32.mxu0 0.0
  %178 = vmatmul.mubr.f32.gmra.mxu0 %v32
  %v179 = vpop.f32.mrf.mxu0
  %v180 = vadd.f32 %v101, %v179
  %v181 = vpop.f32.mrf.mxu0
  %v182 = vadd.f32 %v105, %v181
  %183 = vmatprep.mubr.f32.mxu0 0.0
  %184 = vmatmul.mubr.f32.gmra.mxu0 %v33
  %v185 = vpop.f32.mrf.mxu0
  %v186 = vadd.f32 %v101, %v185
  %v187 = vpop.f32.mrf.mxu0
  %v188 = vadd.f32 %v105, %v187
  %189 = vmatprep.mubr.f32.mxu0 0.0
  %190 = vmatmul.mubr.f32.gmra.mxu0 %v34
  %v191 = vpop.f32.mrf.mxu0
  %v192 = vadd.f32 %v101, %v191
  %v193 = vpop.f32.mrf.mxu0
  %v194 = vadd.f32 %v105, %v193
  %195 = vmatprep.mubr.f32.mxu0 0.0
  %196 = vmatmul.mubr.f32.gmra.mxu0 %v35
  %v197 = vpop.f32.mrf.mxu0
  %v198 = vadd.f32 %v101, %v197
  %v199 = vpop.f32.mrf.mxu0
  %v200 = vadd.f32 %v105, %v199
  %201 = vmatprep.mubr.f32.mxu0 0.0
  %202 = vmatmul.mubr.f32.gmra.mxu0 %v36
  %v203 = vpop.f32.mrf.mxu0
  %v204 = vadd.f32 %v101, %v203
  %v205 = vpop.f32.mrf.mxu0
  %v206 = vadd.f32 %v105, %v205
  %207 = vmatprep.mubr.f32.mxu0 0.0
  %208 = vmatmul.mubr.f32.gmra.mxu0 %v37
  %v209 = vpop.f32.mrf.mxu0
  %v210 = vadd.f32 %v101, %v209
  %v211 = vpop.f32.mrf.mxu0
  %v212 = vadd.f32 %v105, %v211
  %213 = vmatprep.mubr.f32.mxu0 0.0
  %214 = vmatmul.mubr.f32.gmra.mxu0 %v38
  %v215 = vpop.f32.mrf.mxu0
  %v216 = vadd.f32 %v101, %v215
  %v217 = vpop.f32.mrf.mxu0
  %v218 = vadd.f32 %v105, %v217
  %219 = vmatprep.mubr.f32.mxu0 0.0
  %220 = vmatmul.mubr.f32.gmra.mxu0 %v39
  %v221 = vpop.f32.mrf.mxu0
  %v222 = vadd.f32 %v101, %v221
  %v223 = vpop.f32.mrf.mxu0
  %v224 = vadd.f32 %v105, %v223
  %225 = vmatprep.mubr.f32.mxu0 0.0
  %226 = vmatmul.mubr.f32.gmra.mxu0 %v40
  %v227 = vpop.f32.mrf.mxu0
  %v228 = vadd.f32 %v101, %v227
  %v229 = vpop.f32.mrf.mxu0
  %v230 = vadd.f32 %v105, %v229
  %231 = vmatprep.mubr.f32.mxu0 0.0
  %232 = vmatmul.mubr.f32.gmra.mxu0 %v41
  %v233 = vpop.f32.mrf.mxu0
  %v234 = vadd.f32 %v101, %v233
  %v235 = vpop.f32.mrf.mxu0
  %v236 = vadd.f32 %v105, %v235
  %237 = vmatprep.mubr.f32.mxu0 0.0
  %238 = vmatmul.mubr.f32.gmra.mxu0 %v42
  %v239 = vpop.f32.mrf.mxu0
  %v240 = vadd.f32 %v101, %v239
  %v241 = vpop.f32.mrf.mxu0
  %v242 = vadd.f32 %v105, %v241
  %243 = vmatprep.mubr.f32.mxu0 0.0
  %244 = vmatmul.mubr.f32.gmra.mxu0 %v43
  %v245 = vpop.f32.mrf.mxu0
  %v246 = vadd.f32 %v101, %v245
  %v247 = vpop.f32.mrf.mxu0
  %v248 = vadd.f32 %v105, %v247
  %249 = vmatprep.mubr.f32.mxu0 0.0
  %250 = vmatmul.mubr.f32.gmra.mxu0 %v44
  %v251 = vpop.f32.mrf.mxu0
  %v252 = vadd.f32 %v101, %v251
  %v253 = vpop.f32.mrf.mxu0
  %v254 = vadd.f32 %v105, %v253
  %255 = vmatprep.mubr.f32.mxu0 0.0
  %256 = vmatmul.mubr.f32.gmra.mxu0 %v45
  %v257 = vpop.f32.mrf.mxu0
  %v258 = vadd.f32 %v101, %v257
  %v259 = vpop.f32.mrf.mxu0
  %v260 = vadd.f32 %v105, %v259
  %261 = vmatprep.mubr.f32.mxu0 0.0
  %262 = vmatmul.mubr.f32.gmra.mxu0 %v46
  %v263 = vpop.f32.mrf.mxu0
  %v264 = vadd.f32 %v101, %v263
  %v265 = vpop.f32.mrf.mxu0
  %v266 = vadd.f32 %v105, %v265
  %267 = vmatprep.mubr.f32.mxu0 0.0
  %268 = vmatmul.mubr.f32.gmra.mxu0 %v47
  %v269 = vpop.f32.mrf.mxu0
  %v270 = vadd.f32 %v101, %v269
  %v271 = vpop.f32.mrf.mxu0
  %v272 = vadd.f32 %v105, %v271
  %273 = vdwg.mxu0
  %274 = vmatprep.subr.mxu0 0.0
  %275 = vmatpush1.msra.mxu0 %v95
  %276 = vmatprep.subr.mxu0 0.0
  %277 = vmatpush1.msra.mxu0 %v92
  %278 = vmatprep.subr.mxu0 0.0
  %279 = vmatpush1.msra.mxu0 %v89
  %280 = vmatprep.subr.mxu0 0.0
  %281 = vmatpush1.msra.mxu0 %v86
  %282 = vmatprep.subr.mxu0 0.0
  %283 = vmatpush1.msra.mxu0 %v83
  %284 = vmatprep.subr.mxu0 0.0
  %285 = vmatpush1.msra.mxu0 %v80
  %286 = vmatprep.subr.mxu0 0.0
  %287 = vmatpush1.msra.mxu0 %v77
  %288 = vmatprep.subr.mxu0 0.0
  %289 = vmatpush1.msra.mxu0 %v74
  %290 = vmatprep.subr.mxu0 0.0
  %291 = vmatpush1.msra.mxu0 %v71
  %292 = vmatprep.subr.mxu0 0.0
  %293 = vmatpush1.msra.mxu0 %v68
  %294 = vmatprep.subr.mxu0 0.0
  %295 = vmatpush1.msra.mxu0 %v65
  %296 = vmatprep.subr.mxu0 0.0
  %297 = vmatpush1.msra.mxu0 %v62
  %298 = vmatprep.subr.mxu0 0.0
  %299 = vmatpush1.msra.mxu0 %v59
  %300 = vmatprep.subr.mxu0 0.0
  %301 = vmatpush1.msra.mxu0 %v56
  %302 = vmatprep.subr.mxu0 0.0
  %303 = vmatpush1.msra.mxu0 %v53
  %304 = vmatprep.subr.mxu0 0.0
  %305 = vmatpush1.msra.mxu0 %v50
  %306 = vmatprep.subr.mxu0 0.0
  %307 = vmatpush2.msra.mxu0 0.0
  %308 = vmatprep.subr.mxu0 0.0
  %309 = vmatpush2.msra.mxu0 0.0
  %310 = vmatprep.subr.mxu0 0.0
  %311 = vmatpush2.msra.mxu0 0.0
  %312 = vmatprep.subr.mxu0 0.0
  %313 = vmatpush2.msra.mxu0 0.0
  %314 = vmatprep.subr.mxu0 0.0
  %315 = vmatpush2.msra.mxu0 0.0
  %316 = vmatprep.subr.mxu0 0.0
  %317 = vmatpush2.msra.mxu0 0.0
  %318 = vmatprep.subr.mxu0 0.0
  %319 = vmatpush2.msra.mxu0 0.0
  %320 = vmatprep.subr.mxu0 0.0
  %321 = vmatpush2.msra.mxu0 0.0
  %322 = vmatprep.subr.mxu0 0.0
  %323 = vmatpush2.msra.mxu0 0.0
  %324 = vmatprep.subr.mxu0 0.0
  %325 = vmatpush2.msra.mxu0 0.0
  %326 = vmatprep.subr.mxu0 0.0
  %327 = vmatpush2.msra.mxu0 0.0
  %328 = vmatprep.subr.mxu0 0.0
  %329 = vmatpush2.msra.mxu0 0.0
  %330 = vmatprep.subr.mxu0 0.0
  %331 = vmatpush2.msra.mxu0 0.0
  %332 = vmatprep.subr.mxu0 0.0
  %333 = vmatpush2.msra.mxu0 0.0
  %334 = vmatprep.subr.mxu0 0.0
  %335 = vmatpush2.msra.mxu0 0.0
  %336 = vmatprep.subr.mxu0 0.0
  %337 = vmatpush2.msra.mxu0 0.0
  %338 = vmatprep.mubr.f32.mxu0 0.0
  %339 = vmatmul.mubr.f32.gmra.mxu0 %v32
  %v340 = vpop.f32.mrf.mxu0
  %v341 = vadd.f32 %v109, %v340
  %v342 = vpop.f32.mrf.mxu0
  %343 = vmatprep.mubr.f32.mxu0 0.0
  %344 = vmatmul.mubr.f32.gmra.mxu0 %v33
  %v345 = vpop.f32.mrf.mxu0
  %v346 = vadd.f32 %v109, %v345
  %v347 = vpop.f32.mrf.mxu0
  %348 = vmatprep.mubr.f32.mxu0 0.0
  %349 = vmatmul.mubr.f32.gmra.mxu0 %v34
  %v350 = vpop.f32.mrf.mxu0
  %v351 = vadd.f32 %v109, %v350
  %v352 = vpop.f32.mrf.mxu0
  %353 = vmatprep.mubr.f32.mxu0 0.0
  %354 = vmatmul.mubr.f32.gmra.mxu0 %v35
  %v355 = vpop.f32.mrf.mxu0
  %v356 = vadd.f32 %v109, %v355
  %v357 = vpop.f32.mrf.mxu0
  %358 = vmatprep.mubr.f32.mxu0 0.0
  %359 = vmatmul.mubr.f32.gmra.mxu0 %v36
  %v360 = vpop.f32.mrf.mxu0
  %v361 = vadd.f32 %v109, %v360
  %v362 = vpop.f32.mrf.mxu0
  %363 = vmatprep.mubr.f32.mxu0 0.0
  %364 = vmatmul.mubr.f32.gmra.mxu0 %v37
  %v365 = vpop.f32.mrf.mxu0
  %v366 = vadd.f32 %v109, %v365
  %v367 = vpop.f32.mrf.mxu0
  %368 = vmatprep.mubr.f32.mxu0 0.0
  %369 = vmatmul.mubr.f32.gmra.mxu0 %v38
  %v370 = vpop.f32.mrf.mxu0
  %v371 = vadd.f32 %v109, %v370
  %v372 = vpop.f32.mrf.mxu0
  %373 = vmatprep.mubr.f32.mxu0 0.0
  %374 = vmatmul.mubr.f32.gmra.mxu0 %v39
  %v375 = vpop.f32.mrf.mxu0
  %v376 = vadd.f32 %v109, %v375
  %v377 = vpop.f32.mrf.mxu0
  %378 = vmatprep.mubr.f32.mxu0 0.0
  %379 = vmatmul.mubr.f32.gmra.mxu0 %v40
  %v380 = vpop.f32.mrf.mxu0
  %v381 = vadd.f32 %v109, %v380
  %v382 = vpop.f32.mrf.mxu0
  %383 = vmatprep.mubr.f32.mxu0 0.0
  %384 = vmatmul.mubr.f32.gmra.mxu0 %v41
  %v385 = vpop.f32.mrf.mxu0
  %v386 = vadd.f32 %v109, %v385
  %v387 = vpop.f32.mrf.mxu0
  %388 = vmatprep.mubr.f32.mxu0 0.0
  %389 = vmatmul.mubr.f32.gmra.mxu0 %v42
  %v390 = vpop.f32.mrf.mxu0
  %v391 = vadd.f32 %v109, %v390
  %v392 = vpop.f32.mrf.mxu0
  %393 = vmatprep.mubr.f32.mxu0 0.0
  %394 = vmatmul.mubr.f32.gmra.mxu0 %v43
  %v395 = vpop.f32.mrf.mxu0
  %v396 = vadd.f32 %v109, %v395
  %v397 = vpop.f32.mrf.mxu0
  %398 = vmatprep.mubr.f32.mxu0 0.0
  %399 = vmatmul.mubr.f32.gmra.mxu0 %v44
  %v400 = vpop.f32.mrf.mxu0
  %v401 = vadd.f32 %v109, %v400
  %v402 = vpop.f32.mrf.mxu0
  %403 = vmatprep.mubr.f32.mxu0 0.0
  %404 = vmatmul.mubr.f32.gmra.mxu0 %v45
  %v405 = vpop.f32.mrf.mxu0
  %v406 = vadd.f32 %v109, %v405
  %v407 = vpop.f32.mrf.mxu0
  %408 = vmatprep.mubr.f32.mxu0 0.0
  %409 = vmatmul.mubr.f32.gmra.mxu0 %v46
  %v410 = vpop.f32.mrf.mxu0
  %v411 = vadd.f32 %v109, %v410
  %v412 = vpop.f32.mrf.mxu0
  %413 = vmatprep.mubr.f32.mxu0 0.0
  %414 = vmatmul.mubr.f32.gmra.mxu0 %v47
  %v415 = vpop.f32.mrf.mxu0
  %v416 = vadd.f32 %v109, %v415
  %v417 = vpop.f32.mrf.mxu0
  %418 = vdwg.mxu0
  %v419 = vld [vmem:[%s3] sm:$0xff]
  %v420 = vld [vmem:[%s3 + $0x8] sm:$0xff]
  %v421 = vld [vmem:[%s3 + $0x10] sm:$0xff]
  %v422 = vld [vmem:[%s3 + $0x18] sm:$0xff]
  %v423 = vld [vmem:[%s3 + $0x20] sm:$0xff]
  %v424 = vld [vmem:[%s3 + $0x28] sm:$0xff]
  %v425 = vld [vmem:[%s3 + $0x30] sm:$0xff]
  %v426 = vld [vmem:[%s3 + $0x38] sm:$0xff]
  %v427 = vld [vmem:[%s3 + $0x40] sm:$0xff]
  %v428 = vld [vmem:[%s3 + $0x48] sm:$0xff]
  %v429 = vld [vmem:[%s3 + $0x50] sm:$0xff]
  %v430 = vld [vmem:[%s3 + $0x58] sm:$0xff]
  %v431 = vld [vmem:[%s3 + $0x60] sm:$0xff]
  %v432 = vld [vmem:[%s3 + $0x68] sm:$0xff]
  %v433 = vld [vmem:[%s3 + $0x70] sm:$0xff]
  %v434 = vld [vmem:[%s3 + $0x78] sm:$0xff]
  %v435 = vld [vmem:[%s3 + $0x80] sm:$0xff]
  %v436 = vld [vmem:[%s3 + $0x88] sm:$0xff]
  %v437 = vld [vmem:[%s3 + $0x90] sm:$0xff]
  %v438 = vld [vmem:[%s3 + $0x98] sm:$0xff]
  %v439 = vld [vmem:[%s3 + $0xa0] sm:$0xff]
  %v440 = vld [vmem:[%s3 + $0xa8] sm:$0xff]
  %v441 = vld [vmem:[%s3 + $0xb0] sm:$0xff]
  %v442 = vld [vmem:[%s3 + $0xb8] sm:$0xff]
  %v443 = vld [vmem:[%s3 + $0xc0] sm:$0xff]
  %v444 = vld [vmem:[%s3 + $0xc8] sm:$0xff]
  %v445 = vld [vmem:[%s3 + $0xd0] sm:$0xff]
  %v446 = vld [vmem:[%s3 + $0xd8] sm:$0xff]
  %v447 = vld [vmem:[%s3 + $0xe0] sm:$0xff]
  %v448 = vld [vmem:[%s3 + $0xe8] sm:$0xff]
  %v449 = vld [vmem:[%s3 + $0xf0] sm:$0xff]
  %v450 = vld [vmem:[%s3 + $0xf8] sm:$0xff]
  %v451 = vld [vmem:[%s3 + $0x100] sm:$0xff]
  %v452 = vld [vmem:[%s3 + $0x108] sm:$0xff]
  %v453 = vld [vmem:[%s3 + $0x110] sm:$0xff]
  %v454 = vld [vmem:[%s3 + $0x118] sm:$0xff]
  %v455 = vld [vmem:[%s3 + $0x120] sm:$0xff]
  %v456 = vld [vmem:[%s3 + $0x128] sm:$0xff]
  %v457 = vld [vmem:[%s3 + $0x130] sm:$0xff]
  %v458 = vld [vmem:[%s3 + $0x138] sm:$0xff]
  %v459 = vld [vmem:[%s3 + $0x140] sm:$0xff]
  %v460 = vld [vmem:[%s3 + $0x148] sm:$0xff]
  %v461 = vld [vmem:[%s3 + $0x150] sm:$0xff]
  %v462 = vld [vmem:[%s3 + $0x158] sm:$0xff]
  %v463 = vld [vmem:[%s3 + $0x160] sm:$0xff]
  %v464 = vld [vmem:[%s3 + $0x168] sm:$0xff]
  %v465 = vld [vmem:[%s3 + $0x170] sm:$0xff]
  %v466 = vld [vmem:[%s3 + $0x178] sm:$0xff]
  %v467 = vld [vmem:[%s5] sm:$0x1]
  %v469 = vlaneseq
  %v470 = vshrl.u32 %v469, 7
  %v471 = vsub.s32 0, %v470
  %v472 = vrot.slane %v467, %v471
  %v474 = vld [vmem:[%s1] sm:$0xff]
  %v475 = vld [vmem:[%s1 + $0x8] sm:$0xff]
  %476 = vmatprep.subr.mxu0 %v465
  %477 = vmatpush1.msra.mxu0 %v464
  %478 = vmatprep.subr.mxu0 %v462
  %479 = vmatpush1.msra.mxu0 %v461
  %480 = vmatprep.subr.mxu0 %v459
  %481 = vmatpush1.msra.mxu0 %v458
  %482 = vmatprep.subr.mxu0 %v456
  %483 = vmatpush1.msra.mxu0 %v455
  %484 = vmatprep.subr.mxu0 %v453
  %485 = vmatpush1.msra.mxu0 %v452
  %486 = vmatprep.subr.mxu0 %v450
  %487 = vmatpush1.msra.mxu0 %v449
  %488 = vmatprep.subr.mxu0 %v447
  %489 = vmatpush1.msra.mxu0 %v446
  %490 = vmatprep.subr.mxu0 %v444
  %491 = vmatpush1.msra.mxu0 %v443
  %492 = vmatprep.subr.mxu0 %v441
  %493 = vmatpush1.msra.mxu0 %v440
  %494 = vmatprep.subr.mxu0 %v438
  %495 = vmatpush1.msra.mxu0 %v437
  %496 = vmatprep.subr.mxu0 %v435
  %497 = vmatpush1.msra.mxu0 %v434
  %498 = vmatprep.subr.mxu0 %v432
  %499 = vmatpush1.msra.mxu0 %v431
  %500 = vmatprep.subr.mxu0 %v429
  %501 = vmatpush1.msra.mxu0 %v428
  %502 = vmatprep.subr.mxu0 %v426
  %503 = vmatpush1.msra.mxu0 %v425
  %504 = vmatprep.subr.mxu0 %v423
  %505 = vmatpush1.msra.mxu0 %v422
  %506 = vmatprep.subr.mxu0 %v420
  %507 = vmatpush1.msra.mxu0 %v419
  %508 = vmatprep.subr.mxu0 0.0
  %509 = vmatpush2.msra.mxu0 0.0
  %510 = vmatprep.subr.mxu0 0.0
  %511 = vmatpush2.msra.mxu0 0.0
  %512 = vmatprep.subr.mxu0 0.0
  %513 = vmatpush2.msra.mxu0 0.0
  %514 = vmatprep.subr.mxu0 0.0
  %515 = vmatpush2.msra.mxu0 0.0
  %516 = vmatprep.subr.mxu0 0.0
  %517 = vmatpush2.msra.mxu0 0.0
  %518 = vmatprep.subr.mxu0 0.0
  %519 = vmatpush2.msra.mxu0 0.0
  %520 = vmatprep.subr.mxu0 0.0
  %521 = vmatpush2.msra.mxu0 0.0
  %522 = vmatprep.subr.mxu0 0.0
  %523 = vmatpush2.msra.mxu0 0.0
  %524 = vmatprep.subr.mxu0 0.0
  %525 = vmatpush2.msra.mxu0 0.0
  %526 = vmatprep.subr.mxu0 0.0
  %527 = vmatpush2.msra.mxu0 0.0
  %528 = vmatprep.subr.mxu0 0.0
  %529 = vmatpush2.msra.mxu0 0.0
  %530 = vmatprep.subr.mxu0 0.0
  %531 = vmatpush2.msra.mxu0 0.0
  %532 = vmatprep.subr.mxu0 0.0
  %533 = vmatpush2.msra.mxu0 0.0
  %534 = vmatprep.subr.mxu0 0.0
  %535 = vmatpush2.msra.mxu0 0.0
  %536 = vmatprep.subr.mxu0 0.0
  %537 = vmatpush2.msra.mxu0 0.0
  %538 = vmatprep.subr.mxu0 0.0
  %539 = vmatpush2.msra.mxu0 0.0
  %540 = vmatprep.mubr.f32.mxu0 0.0
  %541 = vmatmul.mubr.f32.gmra.mxu0 0.0
  %v542 = vpop.f32.mrf.mxu0
  %v543 = vadd.f32 0.0, %v542
  %v544 = vpop.f32.mrf.mxu0
  %v545 = vadd.f32 0.0, %v544
  %546 = vmatprep.mubr.f32.mxu0 0.0
  %547 = vmatmul.mubr.f32.gmra.mxu0 0.0
  %v548 = vpop.f32.mrf.mxu0
  %v549 = vadd.f32 0.0, %v548
  %v550 = vpop.f32.mrf.mxu0
  %v551 = vadd.f32 0.0, %v550
  %552 = vdwg.mxu0
  %553 = vmatprep.subr.mxu0 0.0
  %554 = vmatpush1.msra.mxu0 %v466
  %555 = vmatprep.subr.mxu0 0.0
  %556 = vmatpush1.msra.mxu0 %v463
  %557 = vmatprep.subr.mxu0 0.0
  %558 = vmatpush1.msra.mxu0 %v460
  %559 = vmatprep.subr.mxu0 0.0
  %560 = vmatpush1.msra.mxu0 %v457
  %561 = vmatprep.subr.mxu0 0.0
  %562 = vmatpush1.msra.mxu0 %v454
  %563 = vmatprep.subr.mxu0 0.0
  %564 = vmatpush1.msra.mxu0 %v451
  %565 = vmatprep.subr.mxu0 0.0
  %566 = vmatpush1.msra.mxu0 %v448
  %567 = vmatprep.subr.mxu0 0.0
  %568 = vmatpush1.msra.mxu0 %v445
  %569 = vmatprep.subr.mxu0 0.0
  %570 = vmatpush1.msra.mxu0 %v442
  %571 = vmatprep.subr.mxu0 0.0
  %572 = vmatpush1.msra.mxu0 %v439
  %573 = vmatprep.subr.mxu0 0.0
  %574 = vmatpush1.msra.mxu0 %v436
  %575 = vmatprep.subr.mxu0 0.0
  %576 = vmatpush1.msra.mxu0 %v433
  %577 = vmatprep.subr.mxu0 0.0
  %578 = vmatpush1.msra.mxu0 %v430
  %579 = vmatprep.subr.mxu0 0.0
  %580 = vmatpush1.msra.mxu0 %v427
  %581 = vmatprep.subr.mxu0 0.0
  %582 = vmatpush1.msra.mxu0 %v424
  %583 = vmatprep.subr.mxu0 0.0
  %584 = vmatpush1.msra.mxu0 %v421
  %585 = vmatprep.subr.mxu0 0.0
  %586 = vmatpush2.msra.mxu0 0.0
  %587 = vmatprep.subr.mxu0 0.0
  %588 = vmatpush2.msra.mxu0 0.0
  %589 = vmatprep.subr.mxu0 0.0
  %590 = vmatpush2.msra.mxu0 0.0
  %591 = vmatprep.subr.mxu0 0.0
  %592 = vmatpush2.msra.mxu0 0.0
  %593 = vmatprep.subr.mxu0 0.0
  %594 = vmatpush2.msra.mxu0 0.0
  %595 = vmatprep.subr.mxu0 0.0
  %596 = vmatpush2.msra.mxu0 0.0
  %597 = vmatprep.subr.mxu0 0.0
  %598 = vmatpush2.msra.mxu0 0.0
  %599 = vmatprep.subr.mxu0 0.0
  %600 = vmatpush2.msra.mxu0 0.0
  %601 = vmatprep.subr.mxu0 0.0
  %602 = vmatpush2.msra.mxu0 0.0
  %603 = vmatprep.subr.mxu0 0.0
  %604 = vmatpush2.msra.mxu0 0.0
  %605 = vmatprep.subr.mxu0 0.0
  %606 = vmatpush2.msra.mxu0 0.0
  %607 = vmatprep.subr.mxu0 0.0
  %608 = vmatpush2.msra.mxu0 0.0
  %609 = vmatprep.subr.mxu0 0.0
  %610 = vmatpush2.msra.mxu0 0.0
  %611 = vmatprep.subr.mxu0 0.0
  %612 = vmatpush2.msra.mxu0 0.0
  %613 = vmatprep.subr.mxu0 0.0
  %614 = vmatpush2.msra.mxu0 0.0
  %615 = vmatprep.subr.mxu0 0.0
  %616 = vmatpush2.msra.mxu0 0.0
  %617 = vmatprep.mubr.f32.mxu0 0.0
  %618 = vmatmul.mubr.f32.gmra.mxu0 0.0
  %v619 = vpop.f32.mrf.mxu0
  %v620 = vadd.f32 0.0, %v619
  %v621 = vpop.f32.mrf.mxu0
  %622 = vmatprep.mubr.f32.mxu0 0.0
  %623 = vmatmul.mubr.f32.gmra.mxu0 0.0
  %v624 = vpop.f32.mrf.mxu0
  %v625 = vadd.f32 0.0, %v624
  %v626 = vpop.f32.mrf.mxu0
  %627 = vdwg.mxu0
  %v628 = vadd.f32 %v180, %v543
  %v629 = vadd.f32 %v186, %v549
  %v630 = vxor.u32 %v628, 2147483648
  %v631 = vxor.u32 %v629, 2147483648
  %v632 = vmul.f32 %v630, 1.442695
  %v633 = vpow.pop %v632
  %v634 = vmul.f32 %v631, 1.442695
  %v635 = vpow.pop %v634
  %v636 = vadd.f32 %v633, 1.0
  %v637 = vadd.f32 %v635, 1.0
  %v638 = vrcp.pop %v636
  %v639 = vmul.f32 1.0, %v638
  %v640 = vrcp.pop %v637
  %v641 = vmul.f32 1.0, %v640
  %v642 = vadd.f32 %v182, %v545
  %v643 = vadd.f32 %v188, %v551
  %v644 = vxor.u32 %v642, 2147483648
  %v645 = vxor.u32 %v643, 2147483648
  %v646 = vmul.f32 %v644, 1.442695
  %v647 = vpow.pop %v646
  %v648 = vmul.f32 %v645, 1.442695
  %v649 = vpow.pop %v648
  %v650 = vadd.f32 %v647, 1.0
  %v651 = vadd.f32 %v649, 1.0
  %v652 = vrcp.pop %v650
  %v653 = vmul.f32 1.0, %v652
  %v654 = vrcp.pop %v651
  %v655 = vmul.f32 1.0, %v654
  %v656 = vadd.f32 %v620, %v472
  %v657 = vadd.f32 %v625, %v472
  %v658 = vmul.f32 %v639, %v656
  %v659 = vmul.f32 %v641, %v657
  %v660 = vadd.f32 %v341, %v658
  %v661 = vadd.f32 %v346, %v659
  %v662 = vtanh.pop %v660
  %v663 = vtanh.pop %v661
  %vm664 = vcmp.gt.s32.totalorder %v474, 0
  %vm665 = vcmp.gt.s32.totalorder %v475, 0
  %v666 = vsel %vm664, 1, 0
  %v667 = vsel %vm665, 1, 0
  %v668 = vcvt.s32.f32 %v666
  %v669 = vcvt.s32.f32 %v667
  %v670 = vsub.f32 1.0, %v653
  %v671 = vsub.f32 1.0, %v655
  %673 = vset.pattern.permute.xlu0 0
  %674 = vperm.xlu0 %673, %v668
  %v675 = vpop.permute.xlu0 %674
  %678 = vset.pattern.permute.xlu0 0
  %679 = vperm.xlu0 %678, %v669
  %v680 = vpop.permute.xlu0 %679
  %v682 = vmul.f32 %v675, %v670
  %v683 = vmul.f32 %v680, %v671
  %v684 = vmul.f32 %v682, %v662
  %v685 = vmul.f32 %v683, %v663
  %v686 = vadd.f32 %v684, 0.0
  %v687 = vadd.f32 %v685, 0.0
  %688 = vmatprep.subr.mxu0 %v465
  %689 = vmatpush1.msra.mxu0 %v464
  %690 = vmatprep.subr.mxu0 %v462
  %691 = vmatpush1.msra.mxu0 %v461
  %692 = vmatprep.subr.mxu0 %v459
  %693 = vmatpush1.msra.mxu0 %v458
  %694 = vmatprep.subr.mxu0 %v456
  %695 = vmatpush1.msra.mxu0 %v455
  %696 = vmatprep.subr.mxu0 %v453
  %697 = vmatpush1.msra.mxu0 %v452
  %698 = vmatprep.subr.mxu0 %v450
  %699 = vmatpush1.msra.mxu0 %v449
  %700 = vmatprep.subr.mxu0 %v447
  %701 = vmatpush1.msra.mxu0 %v446
  %702 = vmatprep.subr.mxu0 %v444
  %703 = vmatpush1.msra.mxu0 %v443
  %704 = vmatprep.subr.mxu0 %v441
  %705 = vmatpush1.msra.mxu0 %v440
  %706 = vmatprep.subr.mxu0 %v438
  %707 = vmatpush1.msra.mxu0 %v437
  %708 = vmatprep.subr.mxu0 %v435
  %709 = vmatpush1.msra.mxu0 %v434
  %710 = vmatprep.subr.mxu0 %v432
  %711 = vmatpush1.msra.mxu0 %v431
  %712 = vmatprep.subr.mxu0 %v429
  %713 = vmatpush1.msra.mxu0 %v428
  %714 = vmatprep.subr.mxu0 %v426
  %715 = vmatpush1.msra.mxu0 %v425
  %716 = vmatprep.subr.mxu0 %v423
  %717 = vmatpush1.msra.mxu0 %v422
  %718 = vmatprep.subr.mxu0 %v420
  %719 = vmatpush1.msra.mxu0 %v419
  %720 = vmatprep.subr.mxu0 0.0
  %721 = vmatpush2.msra.mxu0 0.0
  %722 = vmatprep.subr.mxu0 0.0
  %723 = vmatpush2.msra.mxu0 0.0
  %724 = vmatprep.subr.mxu0 0.0
  %725 = vmatpush2.msra.mxu0 0.0
  %726 = vmatprep.subr.mxu0 0.0
  %727 = vmatpush2.msra.mxu0 0.0
  %728 = vmatprep.subr.mxu0 0.0
  %729 = vmatpush2.msra.mxu0 0.0
  %730 = vmatprep.subr.mxu0 0.0
  %731 = vmatpush2.msra.mxu0 0.0
  %732 = vmatprep.subr.mxu0 0.0
  %733 = vmatpush2.msra.mxu0 0.0
  %734 = vmatprep.subr.mxu0 0.0
  %735 = vmatpush2.msra.mxu0 0.0
  %736 = vmatprep.subr.mxu0 0.0
  %737 = vmatpush2.msra.mxu0 0.0
  %738 = vmatprep.subr.mxu0 0.0
  %739 = vmatpush2.msra.mxu0 0.0
  %740 = vmatprep.subr.mxu0 0.0
  %741 = vmatpush2.msra.mxu0 0.0
  %742 = vmatprep.subr.mxu0 0.0
  %743 = vmatpush2.msra.mxu0 0.0
  %744 = vmatprep.subr.mxu0 0.0
  %745 = vmatpush2.msra.mxu0 0.0
  %746 = vmatprep.subr.mxu0 0.0
  %747 = vmatpush2.msra.mxu0 0.0
  %748 = vmatprep.subr.mxu0 0.0
  %749 = vmatpush2.msra.mxu0 0.0
  %750 = vmatprep.subr.mxu0 0.0
  %751 = vmatpush2.msra.mxu0 0.0
  %752 = vmatprep.mubr.f32.mxu0 0.0
  %753 = vmatmul.mubr.f32.gmra.mxu0 %v686
  %v754 = vpop.f32.mrf.mxu0
  %v755 = vadd.f32 0.0, %v754
  %v756 = vpop.f32.mrf.mxu0
  %v757 = vadd.f32 0.0, %v756
  %758 = vmatprep.mubr.f32.mxu0 0.0
  %759 = vmatmul.mubr.f32.gmra.mxu0 %v687
  %v760 = vpop.f32.mrf.mxu0
  %v761 = vadd.f32 0.0, %v760
  %v762 = vpop.f32.mrf.mxu0
  %v763 = vadd.f32 0.0, %v762
  %764 = vdwg.mxu0
  %765 = vmatprep.subr.mxu0 0.0
  %766 = vmatpush1.msra.mxu0 %v466
  %767 = vmatprep.subr.mxu0 0.0
  %768 = vmatpush1.msra.mxu0 %v463
  %769 = vmatprep.subr.mxu0 0.0
  %770 = vmatpush1.msra.mxu0 %v460
  %771 = vmatprep.subr.mxu0 0.0
  %772 = vmatpush1.msra.mxu0 %v457
  %773 = vmatprep.subr.mxu0 0.0
  %774 = vmatpush1.msra.mxu0 %v454
  %775 = vmatprep.subr.mxu0 0.0
  %776 = vmatpush1.msra.mxu0 %v451
  %777 = vmatprep.subr.mxu0 0.0
  %778 = vmatpush1.msra.mxu0 %v448
  %779 = vmatprep.subr.mxu0 0.0
  %780 = vmatpush1.msra.mxu0 %v445
  %781 = vmatprep.subr.mxu0 0.0
  %782 = vmatpush1.msra.mxu0 %v442
  %783 = vmatprep.subr.mxu0 0.0
  %784 = vmatpush1.msra.mxu0 %v439
  %785 = vmatprep.subr.mxu0 0.0
  %786 = vmatpush1.msra.mxu0 %v436
  %787 = vmatprep.subr.mxu0 0.0
  %788 = vmatpush1.msra.mxu0 %v433
  %789 = vmatprep.subr.mxu0 0.0
  %790 = vmatpush1.msra.mxu0 %v430
  %791 = vmatprep.subr.mxu0 0.0
  %792 = vmatpush1.msra.mxu0 %v427
  %793 = vmatprep.subr.mxu0 0.0
  %794 = vmatpush1.msra.mxu0 %v424
  %795 = vmatprep.subr.mxu0 0.0
  %796 = vmatpush1.msra.mxu0 %v421
  %797 = vmatprep.subr.mxu0 0.0
  %798 = vmatpush2.msra.mxu0 0.0
  %799 = vmatprep.subr.mxu0 0.0
  %800 = vmatpush2.msra.mxu0 0.0
  %801 = vmatprep.subr.mxu0 0.0
  %802 = vmatpush2.msra.mxu0 0.0
  %803 = vmatprep.subr.mxu0 0.0
  %804 = vmatpush2.msra.mxu0 0.0
  %805 = vmatprep.subr.mxu0 0.0
  %806 = vmatpush2.msra.mxu0 0.0
  %807 = vmatprep.subr.mxu0 0.0
  %808 = vmatpush2.msra.mxu0 0.0
  %809 = vmatprep.subr.mxu0 0.0
  %810 = vmatpush2.msra.mxu0 0.0
  %811 = vmatprep.subr.mxu0 0.0
  %812 = vmatpush2.msra.mxu0 0.0
  %813 = vmatprep.subr.mxu0 0.0
  %814 = vmatpush2.msra.mxu0 0.0
  %815 = vmatprep.subr.mxu0 0.0
  %816 = vmatpush2.msra.mxu0 0.0
  %817 = vmatprep.subr.mxu0 0.0
  %818 = vmatpush2.msra.mxu0 0.0
  %819 = vmatprep.subr.mxu0 0.0
  %820 = vmatpush2.msra.mxu0 0.0
  %821 = vmatprep.subr.mxu0 0.0
  %822 = vmatpush2.msra.mxu0 0.0
  %823 = vmatprep.subr.mxu0 0.0
  %824 = vmatpush2.msra.mxu0 0.0
  %825 = vmatprep.subr.mxu0 0.0
  %826 = vmatpush2.msra.mxu0 0.0
  %827 = vmatprep.subr.mxu0 0.0
  %828 = vmatpush2.msra.mxu0 0.0
  %829 = vmatprep.mubr.f32.mxu0 0.0
  %830 = vmatmul.mubr.f32.gmra.mxu0 %v686
  %v831 = vpop.f32.mrf.mxu0
  %v832 = vadd.f32 0.0, %v831
  %v833 = vpop.f32.mrf.mxu0
  %834 = vmatprep.mubr.f32.mxu0 0.0
  %835 = vmatmul.mubr.f32.gmra.mxu0 %v687
  %v836 = vpop.f32.mrf.mxu0
  %v837 = vadd.f32 0.0, %v836
  %v838 = vpop.f32.mrf.mxu0
  %839 = vdwg.mxu0
  %v840 = vadd.f32 %v192, %v755
  %v841 = vadd.f32 %v198, %v761
  %v842 = vxor.u32 %v840, 2147483648
  %v843 = vxor.u32 %v841, 2147483648
  %v844 = vmul.f32 %v842, 1.442695
  %v845 = vpow.pop %v844
  %v846 = vmul.f32 %v843, 1.442695
  %v847 = vpow.pop %v846
  %v848 = vadd.f32 %v845, 1.0
  %v849 = vadd.f32 %v847, 1.0
  %v850 = vrcp.pop %v848
  %v851 = vmul.f32 1.0, %v850
  %v852 = vrcp.pop %v849
  %v853 = vmul.f32 1.0, %v852
  %v854 = vadd.f32 %v194, %v757
  %v855 = vadd.f32 %v200, %v763
  %v856 = vxor.u32 %v854, 2147483648
  %v857 = vxor.u32 %v855, 2147483648
  %v858 = vmul.f32 %v856, 1.442695
  %v859 = vpow.pop %v858
  %v860 = vmul.f32 %v857, 1.442695
  %v861 = vpow.pop %v860
  %v862 = vadd.f32 %v859, 1.0
  %v863 = vadd.f32 %v861, 1.0
  %v864 = vrcp.pop %v862
  %v865 = vmul.f32 1.0, %v864
  %v866 = vrcp.pop %v863
  %v867 = vmul.f32 1.0, %v866
  %v868 = vadd.f32 %v832, %v472
  %v869 = vadd.f32 %v837, %v472
  %v870 = vmul.f32 %v851, %v868
  %v871 = vmul.f32 %v853, %v869
  %v872 = vadd.f32 %v351, %v870
  %v873 = vadd.f32 %v356, %v871
  %v874 = vtanh.pop %v872
  %v875 = vtanh.pop %v873
  %vm876 = vcmp.gt.s32.totalorder %v474, 1
  %vm877 = vcmp.gt.s32.totalorder %v475, 1
  %v878 = vsel %vm876, 1, 0
  %v879 = vsel %vm877, 1, 0
  %v880 = vcvt.s32.f32 %v878
  %v881 = vcvt.s32.f32 %v879
  %v882 = vsub.f32 1.0, %v865
  %v883 = vsub.f32 1.0, %v867
  %885 = vset.pattern.permute.xlu0 0
  %886 = vperm.xlu0 %885, %v880
  %v887 = vpop.permute.xlu0 %886
  %890 = vset.pattern.permute.xlu0 0
  %891 = vperm.xlu0 %890, %v881
  %v892 = vpop.permute.xlu0 %891
  %v894 = vmul.f32 %v887, %v882
  %v895 = vmul.f32 %v892, %v883
  %v896 = vsub.f32 %v874, %v686
  %v897 = vsub.f32 %v875, %v687
  %v898 = vmul.f32 %v894, %v896
  %v899 = vmul.f32 %v895, %v897
  %v900 = vadd.f32 %v686, %v898
  %v901 = vadd.f32 %v687, %v899
  %902 = vmatprep.subr.mxu0 %v465
  %903 = vmatpush1.msra.mxu0 %v464
  %904 = vmatprep.subr.mxu0 %v462
  %905 = vmatpush1.msra.mxu0 %v461
  %906 = vmatprep.subr.mxu0 %v459
  %907 = vmatpush1.msra.mxu0 %v458
  %908 = vmatprep.subr.mxu0 %v456
  %909 = vmatpush1.msra.mxu0 %v455
  %910 = vmatprep.subr.mxu0 %v453
  %911 = vmatpush1.msra.mxu0 %v452
  %912 = vmatprep.subr.mxu0 %v450
  %913 = vmatpush1.msra.mxu0 %v449
  %914 = vmatprep.subr.mxu0 %v447
  %915 = vmatpush1.msra.mxu0 %v446
  %916 = vmatprep.subr.mxu0 %v444
  %917 = vmatpush1.msra.mxu0 %v443
  %918 = vmatprep.subr.mxu0 %v441
  %919 = vmatpush1.msra.mxu0 %v440
  %920 = vmatprep.subr.mxu0 %v438
  %921 = vmatpush1.msra.mxu0 %v437
  %922 = vmatprep.subr.mxu0 %v435
  %923 = vmatpush1.msra.mxu0 %v434
  %924 = vmatprep.subr.mxu0 %v432
  %925 = vmatpush1.msra.mxu0 %v431
  %926 = vmatprep.subr.mxu0 %v429
  %927 = vmatpush1.msra.mxu0 %v428
  %928 = vmatprep.subr.mxu0 %v426
  %929 = vmatpush1.msra.mxu0 %v425
  %930 = vmatprep.subr.mxu0 %v423
  %931 = vmatpush1.msra.mxu0 %v422
  %932 = vmatprep.subr.mxu0 %v420
  %933 = vmatpush1.msra.mxu0 %v419
  %934 = vmatprep.subr.mxu0 0.0
  %935 = vmatpush2.msra.mxu0 0.0
  %936 = vmatprep.subr.mxu0 0.0
  %937 = vmatpush2.msra.mxu0 0.0
  %938 = vmatprep.subr.mxu0 0.0
  %939 = vmatpush2.msra.mxu0 0.0
  %940 = vmatprep.subr.mxu0 0.0
  %941 = vmatpush2.msra.mxu0 0.0
  %942 = vmatprep.subr.mxu0 0.0
  %943 = vmatpush2.msra.mxu0 0.0
  %944 = vmatprep.subr.mxu0 0.0
  %945 = vmatpush2.msra.mxu0 0.0
  %946 = vmatprep.subr.mxu0 0.0
  %947 = vmatpush2.msra.mxu0 0.0
  %948 = vmatprep.subr.mxu0 0.0
  %949 = vmatpush2.msra.mxu0 0.0
  %950 = vmatprep.subr.mxu0 0.0
  %951 = vmatpush2.msra.mxu0 0.0
  %952 = vmatprep.subr.mxu0 0.0
  %953 = vmatpush2.msra.mxu0 0.0
  %954 = vmatprep.subr.mxu0 0.0
  %955 = vmatpush2.msra.mxu0 0.0
  %956 = vmatprep.subr.mxu0 0.0
  %957 = vmatpush2.msra.mxu0 0.0
  %958 = vmatprep.subr.mxu0 0.0
  %959 = vmatpush2.msra.mxu0 0.0
  %960 = vmatprep.subr.mxu0 0.0
  %961 = vmatpush2.msra.mxu0 0.0
  %962 = vmatprep.subr.mxu0 0.0
  %963 = vmatpush2.msra.mxu0 0.0
  %964 = vmatprep.subr.mxu0 0.0
  %965 = vmatpush2.msra.mxu0 0.0
  %966 = vmatprep.mubr.f32.mxu0 0.0
  %967 = vmatmul.mubr.f32.gmra.mxu0 %v900
  %v968 = vpop.f32.mrf.mxu0
  %v969 = vadd.f32 0.0, %v968
  %v970 = vpop.f32.mrf.mxu0
  %v971 = vadd.f32 0.0, %v970
  %972 = vmatprep.mubr.f32.mxu0 0.0
  %973 = vmatmul.mubr.f32.gmra.mxu0 %v901
  %v974 = vpop.f32.mrf.mxu0
  %v975 = vadd.f32 0.0, %v974
  %v976 = vpop.f32.mrf.mxu0
  %v977 = vadd.f32 0.0, %v976
  %978 = vdwg.mxu0
  %979 = vmatprep.subr.mxu0 0.0
  %980 = vmatpush1.msra.mxu0 %v466
  %981 = vmatprep.subr.mxu0 0.0
  %982 = vmatpush1.msra.mxu0 %v463
  %983 = vmatprep.subr.mxu0 0.0
  %984 = vmatpush1.msra.mxu0 %v460
  %985 = vmatprep.subr.mxu0 0.0
  %986 = vmatpush1.msra.mxu0 %v457
  %987 = vmatprep.subr.mxu0 0.0
  %988 = vmatpush1.msra.mxu0 %v454
  %989 = vmatprep.subr.mxu0 0.0
  %990 = vmatpush1.msra.mxu0 %v451
  %991 = vmatprep.subr.mxu0 0.0
  %992 = vmatpush1.msra.mxu0 %v448
  %993 = vmatprep.subr.mxu0 0.0
  %994 = vmatpush1.msra.mxu0 %v445
  %995 = vmatprep.subr.mxu0 0.0
  %996 = vmatpush1.msra.mxu0 %v442
  %997 = vmatprep.subr.mxu0 0.0
  %998 = vmatpush1.msra.mxu0 %v439
  %999 = vmatprep.subr.mxu0 0.0
  %1000 = vmatpush1.msra.mxu0 %v436
  %1001 = vmatprep.subr.mxu0 0.0
  %1002 = vmatpush1.msra.mxu0 %v433
  %1003 = vmatprep.subr.mxu0 0.0
  %1004 = vmatpush1.msra.mxu0 %v430
  %1005 = vmatprep.subr.mxu0 0.0
  %1006 = vmatpush1.msra.mxu0 %v427
  %1007 = vmatprep.subr.mxu0 0.0
  %1008 = vmatpush1.msra.mxu0 %v424
  %1009 = vmatprep.subr.mxu0 0.0
  %1010 = vmatpush1.msra.mxu0 %v421
  %1011 = vmatprep.subr.mxu0 0.0
  %1012 = vmatpush2.msra.mxu0 0.0
  %1013 = vmatprep.subr.mxu0 0.0
  %1014 = vmatpush2.msra.mxu0 0.0
  %1015 = vmatprep.subr.mxu0 0.0
  %1016 = vmatpush2.msra.mxu0 0.0
  %1017 = vmatprep.subr.mxu0 0.0
  %1018 = vmatpush2.msra.mxu0 0.0
  %1019 = vmatprep.subr.mxu0 0.0
  %1020 = vmatpush2.msra.mxu0 0.0
  %1021 = vmatprep.subr.mxu0 0.0
  %1022 = vmatpush2.msra.mxu0 0.0
  %1023 = vmatprep.subr.mxu0 0.0
  %1024 = vmatpush2.msra.mxu0 0.0
  %1025 = vmatprep.subr.mxu0 0.0
  %1026 = vmatpush2.msra.mxu0 0.0
  %1027 = vmatprep.subr.mxu0 0.0
  %1028 = vmatpush2.msra.mxu0 0.0
  %1029 = vmatprep.subr.mxu0 0.0
  %1030 = vmatpush2.msra.mxu0 0.0
  %1031 = vmatprep.subr.mxu0 0.0
  %1032 = vmatpush2.msra.mxu0 0.0
  %1033 = vmatprep.subr.mxu0 0.0
  %1034 = vmatpush2.msra.mxu0 0.0
  %1035 = vmatprep.subr.mxu0 0.0
  %1036 = vmatpush2.msra.mxu0 0.0
  %1037 = vmatprep.subr.mxu0 0.0
  %1038 = vmatpush2.msra.mxu0 0.0
  %1039 = vmatprep.subr.mxu0 0.0
  %1040 = vmatpush2.msra.mxu0 0.0
  %1041 = vmatprep.subr.mxu0 0.0
  %1042 = vmatpush2.msra.mxu0 0.0
  %1043 = vmatprep.mubr.f32.mxu0 0.0
  %1044 = vmatmul.mubr.f32.gmra.mxu0 %v900
  %v1045 = vpop.f32.mrf.mxu0
  %v1046 = vadd.f32 0.0, %v1045
  %v1047 = vpop.f32.mrf.mxu0
  %1048 = vmatprep.mubr.f32.mxu0 0.0
  %1049 = vmatmul.mubr.f32.gmra.mxu0 %v901
  %v1050 = vpop.f32.mrf.mxu0
  %v1051 = vadd.f32 0.0, %v1050
  %v1052 = vpop.f32.mrf.mxu0
  %1053 = vdwg.mxu0
  %v1054 = vadd.f32 %v204, %v969
  %v1055 = vadd.f32 %v210, %v975
  %v1056 = vxor.u32 %v1054, 2147483648
  %v1057 = vxor.u32 %v1055, 2147483648
  %v1058 = vmul.f32 %v1056, 1.442695
  %v1059 = vpow.pop %v1058
  %v1060 = vmul.f32 %v1057, 1.442695
  %v1061 = vpow.pop %v1060
  %v1062 = vadd.f32 %v1059, 1.0
  %v1063 = vadd.f32 %v1061, 1.0
  %v1064 = vrcp.pop %v1062
  %v1065 = vmul.f32 1.0, %v1064
  %v1066 = vrcp.pop %v1063
  %v1067 = vmul.f32 1.0, %v1066
  %v1068 = vadd.f32 %v206, %v971
  %v1069 = vadd.f32 %v212, %v977
  %v1070 = vxor.u32 %v1068, 2147483648
  %v1071 = vxor.u32 %v1069, 2147483648
  %v1072 = vmul.f32 %v1070, 1.442695
  %v1073 = vpow.pop %v1072
  %v1074 = vmul.f32 %v1071, 1.442695
  %v1075 = vpow.pop %v1074
  %v1076 = vadd.f32 %v1073, 1.0
  %v1077 = vadd.f32 %v1075, 1.0
  %v1078 = vrcp.pop %v1076
  %v1079 = vmul.f32 1.0, %v1078
  %v1080 = vrcp.pop %v1077
  %v1081 = vmul.f32 1.0, %v1080
  %v1082 = vadd.f32 %v1046, %v472
  %v1083 = vadd.f32 %v1051, %v472
  %v1084 = vmul.f32 %v1065, %v1082
  %v1085 = vmul.f32 %v1067, %v1083
  %v1086 = vadd.f32 %v361, %v1084
  %v1087 = vadd.f32 %v366, %v1085
  %v1088 = vtanh.pop %v1086
  %v1089 = vtanh.pop %v1087
  %vm1090 = vcmp.gt.s32.totalorder %v474, 2
  %vm1091 = vcmp.gt.s32.totalorder %v475, 2
  %v1092 = vsel %vm1090, 1, 0
  %v1093 = vsel %vm1091, 1, 0
  %v1094 = vcvt.s32.f32 %v1092
  %v1095 = vcvt.s32.f32 %v1093
  %v1096 = vsub.f32 1.0, %v1079
  %v1097 = vsub.f32 1.0, %v1081
  %1099 = vset.pattern.permute.xlu0 0
  %1100 = vperm.xlu0 %1099, %v1094
  %v1101 = vpop.permute.xlu0 %1100
  %1104 = vset.pattern.permute.xlu0 0
  %1105 = vperm.xlu0 %1104, %v1095
  %v1106 = vpop.permute.xlu0 %1105
  %v1108 = vmul.f32 %v1101, %v1096
  %v1109 = vmul.f32 %v1106, %v1097
  %v1110 = vsub.f32 %v1088, %v900
  %v1111 = vsub.f32 %v1089, %v901
  %v1112 = vmul.f32 %v1108, %v1110
  %v1113 = vmul.f32 %v1109, %v1111
  %v1114 = vadd.f32 %v900, %v1112
  %v1115 = vadd.f32 %v901, %v1113
  %1116 = vmatprep.subr.mxu0 %v465
  %1117 = vmatpush1.msra.mxu0 %v464
  %1118 = vmatprep.subr.mxu0 %v462
  %1119 = vmatpush1.msra.mxu0 %v461
  %1120 = vmatprep.subr.mxu0 %v459
  %1121 = vmatpush1.msra.mxu0 %v458
  %1122 = vmatprep.subr.mxu0 %v456
  %1123 = vmatpush1.msra.mxu0 %v455
  %1124 = vmatprep.subr.mxu0 %v453
  %1125 = vmatpush1.msra.mxu0 %v452
  %1126 = vmatprep.subr.mxu0 %v450
  %1127 = vmatpush1.msra.mxu0 %v449
  %1128 = vmatprep.subr.mxu0 %v447
  %1129 = vmatpush1.msra.mxu0 %v446
  %1130 = vmatprep.subr.mxu0 %v444
  %1131 = vmatpush1.msra.mxu0 %v443
  %1132 = vmatprep.subr.mxu0 %v441
  %1133 = vmatpush1.msra.mxu0 %v440
  %1134 = vmatprep.subr.mxu0 %v438
  %1135 = vmatpush1.msra.mxu0 %v437
  %1136 = vmatprep.subr.mxu0 %v435
  %1137 = vmatpush1.msra.mxu0 %v434
  %1138 = vmatprep.subr.mxu0 %v432
  %1139 = vmatpush1.msra.mxu0 %v431
  %1140 = vmatprep.subr.mxu0 %v429
  %1141 = vmatpush1.msra.mxu0 %v428
  %1142 = vmatprep.subr.mxu0 %v426
  %1143 = vmatpush1.msra.mxu0 %v425
  %1144 = vmatprep.subr.mxu0 %v423
  %1145 = vmatpush1.msra.mxu0 %v422
  %1146 = vmatprep.subr.mxu0 %v420
  %1147 = vmatpush1.msra.mxu0 %v419
  %1148 = vmatprep.subr.mxu0 0.0
  %1149 = vmatpush2.msra.mxu0 0.0
  %1150 = vmatprep.subr.mxu0 0.0
  %1151 = vmatpush2.msra.mxu0 0.0
  %1152 = vmatprep.subr.mxu0 0.0
  %1153 = vmatpush2.msra.mxu0 0.0
  %1154 = vmatprep.subr.mxu0 0.0
  %1155 = vmatpush2.msra.mxu0 0.0
  %1156 = vmatprep.subr.mxu0 0.0
  %1157 = vmatpush2.msra.mxu0 0.0
  %1158 = vmatprep.subr.mxu0 0.0
  %1159 = vmatpush2.msra.mxu0 0.0
  %1160 = vmatprep.subr.mxu0 0.0
  %1161 = vmatpush2.msra.mxu0 0.0
  %1162 = vmatprep.subr.mxu0 0.0
  %1163 = vmatpush2.msra.mxu0 0.0
  %1164 = vmatprep.subr.mxu0 0.0
  %1165 = vmatpush2.msra.mxu0 0.0
  %1166 = vmatprep.subr.mxu0 0.0
  %1167 = vmatpush2.msra.mxu0 0.0
  %1168 = vmatprep.subr.mxu0 0.0
  %1169 = vmatpush2.msra.mxu0 0.0
  %1170 = vmatprep.subr.mxu0 0.0
  %1171 = vmatpush2.msra.mxu0 0.0
  %1172 = vmatprep.subr.mxu0 0.0
  %1173 = vmatpush2.msra.mxu0 0.0
  %1174 = vmatprep.subr.mxu0 0.0
  %1175 = vmatpush2.msra.mxu0 0.0
  %1176 = vmatprep.subr.mxu0 0.0
  %1177 = vmatpush2.msra.mxu0 0.0
  %1178 = vmatprep.subr.mxu0 0.0
  %1179 = vmatpush2.msra.mxu0 0.0
  %1180 = vmatprep.mubr.f32.mxu0 0.0
  %1181 = vmatmul.mubr.f32.gmra.mxu0 %v1114
  %v1182 = vpop.f32.mrf.mxu0
  %v1183 = vadd.f32 0.0, %v1182
  %v1184 = vpop.f32.mrf.mxu0
  %v1185 = vadd.f32 0.0, %v1184
  %1186 = vmatprep.mubr.f32.mxu0 0.0
  %1187 = vmatmul.mubr.f32.gmra.mxu0 %v1115
  %v1188 = vpop.f32.mrf.mxu0
  %v1189 = vadd.f32 0.0, %v1188
  %v1190 = vpop.f32.mrf.mxu0
  %v1191 = vadd.f32 0.0, %v1190
  %1192 = vdwg.mxu0
  %1193 = vmatprep.subr.mxu0 0.0
  %1194 = vmatpush1.msra.mxu0 %v466
  %1195 = vmatprep.subr.mxu0 0.0
  %1196 = vmatpush1.msra.mxu0 %v463
  %1197 = vmatprep.subr.mxu0 0.0
  %1198 = vmatpush1.msra.mxu0 %v460
  %1199 = vmatprep.subr.mxu0 0.0
  %1200 = vmatpush1.msra.mxu0 %v457
  %1201 = vmatprep.subr.mxu0 0.0
  %1202 = vmatpush1.msra.mxu0 %v454
  %1203 = vmatprep.subr.mxu0 0.0
  %1204 = vmatpush1.msra.mxu0 %v451
  %1205 = vmatprep.subr.mxu0 0.0
  %1206 = vmatpush1.msra.mxu0 %v448
  %1207 = vmatprep.subr.mxu0 0.0
  %1208 = vmatpush1.msra.mxu0 %v445
  %1209 = vmatprep.subr.mxu0 0.0
  %1210 = vmatpush1.msra.mxu0 %v442
  %1211 = vmatprep.subr.mxu0 0.0
  %1212 = vmatpush1.msra.mxu0 %v439
  %1213 = vmatprep.subr.mxu0 0.0
  %1214 = vmatpush1.msra.mxu0 %v436
  %1215 = vmatprep.subr.mxu0 0.0
  %1216 = vmatpush1.msra.mxu0 %v433
  %1217 = vmatprep.subr.mxu0 0.0
  %1218 = vmatpush1.msra.mxu0 %v430
  %1219 = vmatprep.subr.mxu0 0.0
  %1220 = vmatpush1.msra.mxu0 %v427
  %1221 = vmatprep.subr.mxu0 0.0
  %1222 = vmatpush1.msra.mxu0 %v424
  %1223 = vmatprep.subr.mxu0 0.0
  %1224 = vmatpush1.msra.mxu0 %v421
  %1225 = vmatprep.subr.mxu0 0.0
  %1226 = vmatpush2.msra.mxu0 0.0
  %1227 = vmatprep.subr.mxu0 0.0
  %1228 = vmatpush2.msra.mxu0 0.0
  %1229 = vmatprep.subr.mxu0 0.0
  %1230 = vmatpush2.msra.mxu0 0.0
  %1231 = vmatprep.subr.mxu0 0.0
  %1232 = vmatpush2.msra.mxu0 0.0
  %1233 = vmatprep.subr.mxu0 0.0
  %1234 = vmatpush2.msra.mxu0 0.0
  %1235 = vmatprep.subr.mxu0 0.0
  %1236 = vmatpush2.msra.mxu0 0.0
  %1237 = vmatprep.subr.mxu0 0.0
  %1238 = vmatpush2.msra.mxu0 0.0
  %1239 = vmatprep.subr.mxu0 0.0
  %1240 = vmatpush2.msra.mxu0 0.0
  %1241 = vmatprep.subr.mxu0 0.0
  %1242 = vmatpush2.msra.mxu0 0.0
  %1243 = vmatprep.subr.mxu0 0.0
  %1244 = vmatpush2.msra.mxu0 0.0
  %1245 = vmatprep.subr.mxu0 0.0
  %1246 = vmatpush2.msra.mxu0 0.0
  %1247 = vmatprep.subr.mxu0 0.0
  %1248 = vmatpush2.msra.mxu0 0.0
  %1249 = vmatprep.subr.mxu0 0.0
  %1250 = vmatpush2.msra.mxu0 0.0
  %1251 = vmatprep.subr.mxu0 0.0
  %1252 = vmatpush2.msra.mxu0 0.0
  %1253 = vmatprep.subr.mxu0 0.0
  %1254 = vmatpush2.msra.mxu0 0.0
  %1255 = vmatprep.subr.mxu0 0.0
  %1256 = vmatpush2.msra.mxu0 0.0
  %1257 = vmatprep.mubr.f32.mxu0 0.0
  %1258 = vmatmul.mubr.f32.gmra.mxu0 %v1114
  %v1259 = vpop.f32.mrf.mxu0
  %v1260 = vadd.f32 0.0, %v1259
  %v1261 = vpop.f32.mrf.mxu0
  %1262 = vmatprep.mubr.f32.mxu0 0.0
  %1263 = vmatmul.mubr.f32.gmra.mxu0 %v1115
  %v1264 = vpop.f32.mrf.mxu0
  %v1265 = vadd.f32 0.0, %v1264
  %v1266 = vpop.f32.mrf.mxu0
  %1267 = vdwg.mxu0
  %v1268 = vadd.f32 %v216, %v1183
  %v1269 = vadd.f32 %v222, %v1189
  %v1270 = vxor.u32 %v1268, 2147483648
  %v1271 = vxor.u32 %v1269, 2147483648
  %v1272 = vmul.f32 %v1270, 1.442695
  %v1273 = vpow.pop %v1272
  %v1274 = vmul.f32 %v1271, 1.442695
  %v1275 = vpow.pop %v1274
  %v1276 = vadd.f32 %v1273, 1.0
  %v1277 = vadd.f32 %v1275, 1.0
  %v1278 = vrcp.pop %v1276
  %v1279 = vmul.f32 1.0, %v1278
  %v1280 = vrcp.pop %v1277
  %v1281 = vmul.f32 1.0, %v1280
  %v1282 = vadd.f32 %v218, %v1185
  %v1283 = vadd.f32 %v224, %v1191
  %v1284 = vxor.u32 %v1282, 2147483648
  %v1285 = vxor.u32 %v1283, 2147483648
  %v1286 = vmul.f32 %v1284, 1.442695
  %v1287 = vpow.pop %v1286
  %v1288 = vmul.f32 %v1285, 1.442695
  %v1289 = vpow.pop %v1288
  %v1290 = vadd.f32 %v1287, 1.0
  %v1291 = vadd.f32 %v1289, 1.0
  %v1292 = vrcp.pop %v1290
  %v1293 = vmul.f32 1.0, %v1292
  %v1294 = vrcp.pop %v1291
  %v1295 = vmul.f32 1.0, %v1294
  %v1296 = vadd.f32 %v1260, %v472
  %v1297 = vadd.f32 %v1265, %v472
  %v1298 = vmul.f32 %v1279, %v1296
  %v1299 = vmul.f32 %v1281, %v1297
  %v1300 = vadd.f32 %v371, %v1298
  %v1301 = vadd.f32 %v376, %v1299
  %v1302 = vtanh.pop %v1300
  %v1303 = vtanh.pop %v1301
  %vm1304 = vcmp.gt.s32.totalorder %v474, 3
  %vm1305 = vcmp.gt.s32.totalorder %v475, 3
  %v1306 = vsel %vm1304, 1, 0
  %v1307 = vsel %vm1305, 1, 0
  %v1308 = vcvt.s32.f32 %v1306
  %v1309 = vcvt.s32.f32 %v1307
  %v1310 = vsub.f32 1.0, %v1293
  %v1311 = vsub.f32 1.0, %v1295
  %1313 = vset.pattern.permute.xlu0 0
  %1314 = vperm.xlu0 %1313, %v1308
  %v1315 = vpop.permute.xlu0 %1314
  %1318 = vset.pattern.permute.xlu0 0
  %1319 = vperm.xlu0 %1318, %v1309
  %v1320 = vpop.permute.xlu0 %1319
  %v1322 = vmul.f32 %v1315, %v1310
  %v1323 = vmul.f32 %v1320, %v1311
  %v1324 = vsub.f32 %v1302, %v1114
  %v1325 = vsub.f32 %v1303, %v1115
  %v1326 = vmul.f32 %v1322, %v1324
  %v1327 = vmul.f32 %v1323, %v1325
  %v1328 = vadd.f32 %v1114, %v1326
  %v1329 = vadd.f32 %v1115, %v1327
  %1330 = vmatprep.subr.mxu0 %v465
  %1331 = vmatpush1.msra.mxu0 %v464
  %1332 = vmatprep.subr.mxu0 %v462
  %1333 = vmatpush1.msra.mxu0 %v461
  %1334 = vmatprep.subr.mxu0 %v459
  %1335 = vmatpush1.msra.mxu0 %v458
  %1336 = vmatprep.subr.mxu0 %v456
  %1337 = vmatpush1.msra.mxu0 %v455
  %1338 = vmatprep.subr.mxu0 %v453
  %1339 = vmatpush1.msra.mxu0 %v452
  %1340 = vmatprep.subr.mxu0 %v450
  %1341 = vmatpush1.msra.mxu0 %v449
  %1342 = vmatprep.subr.mxu0 %v447
  %1343 = vmatpush1.msra.mxu0 %v446
  %1344 = vmatprep.subr.mxu0 %v444
  %1345 = vmatpush1.msra.mxu0 %v443
  %1346 = vmatprep.subr.mxu0 %v441
  %1347 = vmatpush1.msra.mxu0 %v440
  %1348 = vmatprep.subr.mxu0 %v438
  %1349 = vmatpush1.msra.mxu0 %v437
  %1350 = vmatprep.subr.mxu0 %v435
  %1351 = vmatpush1.msra.mxu0 %v434
  %1352 = vmatprep.subr.mxu0 %v432
  %1353 = vmatpush1.msra.mxu0 %v431
  %1354 = vmatprep.subr.mxu0 %v429
  %1355 = vmatpush1.msra.mxu0 %v428
  %1356 = vmatprep.subr.mxu0 %v426
  %1357 = vmatpush1.msra.mxu0 %v425
  %1358 = vmatprep.subr.mxu0 %v423
  %1359 = vmatpush1.msra.mxu0 %v422
  %1360 = vmatprep.subr.mxu0 %v420
  %1361 = vmatpush1.msra.mxu0 %v419
  %1362 = vmatprep.subr.mxu0 0.0
  %1363 = vmatpush2.msra.mxu0 0.0
  %1364 = vmatprep.subr.mxu0 0.0
  %1365 = vmatpush2.msra.mxu0 0.0
  %1366 = vmatprep.subr.mxu0 0.0
  %1367 = vmatpush2.msra.mxu0 0.0
  %1368 = vmatprep.subr.mxu0 0.0
  %1369 = vmatpush2.msra.mxu0 0.0
  %1370 = vmatprep.subr.mxu0 0.0
  %1371 = vmatpush2.msra.mxu0 0.0
  %1372 = vmatprep.subr.mxu0 0.0
  %1373 = vmatpush2.msra.mxu0 0.0
  %1374 = vmatprep.subr.mxu0 0.0
  %1375 = vmatpush2.msra.mxu0 0.0
  %1376 = vmatprep.subr.mxu0 0.0
  %1377 = vmatpush2.msra.mxu0 0.0
  %1378 = vmatprep.subr.mxu0 0.0
  %1379 = vmatpush2.msra.mxu0 0.0
  %1380 = vmatprep.subr.mxu0 0.0
  %1381 = vmatpush2.msra.mxu0 0.0
  %1382 = vmatprep.subr.mxu0 0.0
  %1383 = vmatpush2.msra.mxu0 0.0
  %1384 = vmatprep.subr.mxu0 0.0
  %1385 = vmatpush2.msra.mxu0 0.0
  %1386 = vmatprep.subr.mxu0 0.0
  %1387 = vmatpush2.msra.mxu0 0.0
  %1388 = vmatprep.subr.mxu0 0.0
  %1389 = vmatpush2.msra.mxu0 0.0
  %1390 = vmatprep.subr.mxu0 0.0
  %1391 = vmatpush2.msra.mxu0 0.0
  %1392 = vmatprep.subr.mxu0 0.0
  %1393 = vmatpush2.msra.mxu0 0.0
  %1394 = vmatprep.mubr.f32.mxu0 0.0
  %1395 = vmatmul.mubr.f32.gmra.mxu0 %v1328
  %v1396 = vpop.f32.mrf.mxu0
  %v1397 = vadd.f32 0.0, %v1396
  %v1398 = vpop.f32.mrf.mxu0
  %v1399 = vadd.f32 0.0, %v1398
  %1400 = vmatprep.mubr.f32.mxu0 0.0
  %1401 = vmatmul.mubr.f32.gmra.mxu0 %v1329
  %v1402 = vpop.f32.mrf.mxu0
  %v1403 = vadd.f32 0.0, %v1402
  %v1404 = vpop.f32.mrf.mxu0
  %v1405 = vadd.f32 0.0, %v1404
  %1406 = vdwg.mxu0
  %1407 = vmatprep.subr.mxu0 0.0
  %1408 = vmatpush1.msra.mxu0 %v466
  %1409 = vmatprep.subr.mxu0 0.0
  %1410 = vmatpush1.msra.mxu0 %v463
  %1411 = vmatprep.subr.mxu0 0.0
  %1412 = vmatpush1.msra.mxu0 %v460
  %1413 = vmatprep.subr.mxu0 0.0
  %1414 = vmatpush1.msra.mxu0 %v457
  %1415 = vmatprep.subr.mxu0 0.0
  %1416 = vmatpush1.msra.mxu0 %v454
  %1417 = vmatprep.subr.mxu0 0.0
  %1418 = vmatpush1.msra.mxu0 %v451
  %1419 = vmatprep.subr.mxu0 0.0
  %1420 = vmatpush1.msra.mxu0 %v448
  %1421 = vmatprep.subr.mxu0 0.0
  %1422 = vmatpush1.msra.mxu0 %v445
  %1423 = vmatprep.subr.mxu0 0.0
  %1424 = vmatpush1.msra.mxu0 %v442
  %1425 = vmatprep.subr.mxu0 0.0
  %1426 = vmatpush1.msra.mxu0 %v439
  %1427 = vmatprep.subr.mxu0 0.0
  %1428 = vmatpush1.msra.mxu0 %v436
  %1429 = vmatprep.subr.mxu0 0.0
  %1430 = vmatpush1.msra.mxu0 %v433
  %1431 = vmatprep.subr.mxu0 0.0
  %1432 = vmatpush1.msra.mxu0 %v430
  %1433 = vmatprep.subr.mxu0 0.0
  %1434 = vmatpush1.msra.mxu0 %v427
  %1435 = vmatprep.subr.mxu0 0.0
  %1436 = vmatpush1.msra.mxu0 %v424
  %1437 = vmatprep.subr.mxu0 0.0
  %1438 = vmatpush1.msra.mxu0 %v421
  %1439 = vmatprep.subr.mxu0 0.0
  %1440 = vmatpush2.msra.mxu0 0.0
  %1441 = vmatprep.subr.mxu0 0.0
  %1442 = vmatpush2.msra.mxu0 0.0
  %1443 = vmatprep.subr.mxu0 0.0
  %1444 = vmatpush2.msra.mxu0 0.0
  %1445 = vmatprep.subr.mxu0 0.0
  %1446 = vmatpush2.msra.mxu0 0.0
  %1447 = vmatprep.subr.mxu0 0.0
  %1448 = vmatpush2.msra.mxu0 0.0
  %1449 = vmatprep.subr.mxu0 0.0
  %1450 = vmatpush2.msra.mxu0 0.0
  %1451 = vmatprep.subr.mxu0 0.0
  %1452 = vmatpush2.msra.mxu0 0.0
  %1453 = vmatprep.subr.mxu0 0.0
  %1454 = vmatpush2.msra.mxu0 0.0
  %1455 = vmatprep.subr.mxu0 0.0
  %1456 = vmatpush2.msra.mxu0 0.0
  %1457 = vmatprep.subr.mxu0 0.0
  %1458 = vmatpush2.msra.mxu0 0.0
  %1459 = vmatprep.subr.mxu0 0.0
  %1460 = vmatpush2.msra.mxu0 0.0
  %1461 = vmatprep.subr.mxu0 0.0
  %1462 = vmatpush2.msra.mxu0 0.0
  %1463 = vmatprep.subr.mxu0 0.0
  %1464 = vmatpush2.msra.mxu0 0.0
  %1465 = vmatprep.subr.mxu0 0.0
  %1466 = vmatpush2.msra.mxu0 0.0
  %1467 = vmatprep.subr.mxu0 0.0
  %1468 = vmatpush2.msra.mxu0 0.0
  %1469 = vmatprep.subr.mxu0 0.0
  %1470 = vmatpush2.msra.mxu0 0.0
  %1471 = vmatprep.mubr.f32.mxu0 0.0
  %1472 = vmatmul.mubr.f32.gmra.mxu0 %v1328
  %v1473 = vpop.f32.mrf.mxu0
  %v1474 = vadd.f32 0.0, %v1473
  %v1475 = vpop.f32.mrf.mxu0
  %1476 = vmatprep.mubr.f32.mxu0 0.0
  %1477 = vmatmul.mubr.f32.gmra.mxu0 %v1329
  %v1478 = vpop.f32.mrf.mxu0
  %v1479 = vadd.f32 0.0, %v1478
  %v1480 = vpop.f32.mrf.mxu0
  %1481 = vdwg.mxu0
  %v1482 = vadd.f32 %v228, %v1397
  %v1483 = vadd.f32 %v234, %v1403
  %v1484 = vxor.u32 %v1482, 2147483648
  %v1485 = vxor.u32 %v1483, 2147483648
  %v1486 = vmul.f32 %v1484, 1.442695
  %v1487 = vpow.pop %v1486
  %v1488 = vmul.f32 %v1485, 1.442695
  %v1489 = vpow.pop %v1488
  %v1490 = vadd.f32 %v1487, 1.0
  %v1491 = vadd.f32 %v1489, 1.0
  %v1492 = vrcp.pop %v1490
  %v1493 = vmul.f32 1.0, %v1492
  %v1494 = vrcp.pop %v1491
  %v1495 = vmul.f32 1.0, %v1494
  %v1496 = vadd.f32 %v230, %v1399
  %v1497 = vadd.f32 %v236, %v1405
  %v1498 = vxor.u32 %v1496, 2147483648
  %v1499 = vxor.u32 %v1497, 2147483648
  %v1500 = vmul.f32 %v1498, 1.442695
  %v1501 = vpow.pop %v1500
  %v1502 = vmul.f32 %v1499, 1.442695
  %v1503 = vpow.pop %v1502
  %v1504 = vadd.f32 %v1501, 1.0
  %v1505 = vadd.f32 %v1503, 1.0
  %v1506 = vrcp.pop %v1504
  %v1507 = vmul.f32 1.0, %v1506
  %v1508 = vrcp.pop %v1505
  %v1509 = vmul.f32 1.0, %v1508
  %v1510 = vadd.f32 %v1474, %v472
  %v1511 = vadd.f32 %v1479, %v472
  %v1512 = vmul.f32 %v1493, %v1510
  %v1513 = vmul.f32 %v1495, %v1511
  %v1514 = vadd.f32 %v381, %v1512
  %v1515 = vadd.f32 %v386, %v1513
  %v1516 = vtanh.pop %v1514
  %v1517 = vtanh.pop %v1515
  %vm1518 = vcmp.gt.s32.totalorder %v474, 4
  %vm1519 = vcmp.gt.s32.totalorder %v475, 4
  %v1520 = vsel %vm1518, 1, 0
  %v1521 = vsel %vm1519, 1, 0
  %v1522 = vcvt.s32.f32 %v1520
  %v1523 = vcvt.s32.f32 %v1521
  %v1524 = vsub.f32 1.0, %v1507
  %v1525 = vsub.f32 1.0, %v1509
  %1527 = vset.pattern.permute.xlu0 0
  %1528 = vperm.xlu0 %1527, %v1522
  %v1529 = vpop.permute.xlu0 %1528
  %1532 = vset.pattern.permute.xlu0 0
  %1533 = vperm.xlu0 %1532, %v1523
  %v1534 = vpop.permute.xlu0 %1533
  %v1536 = vmul.f32 %v1529, %v1524
  %v1537 = vmul.f32 %v1534, %v1525
  %v1538 = vsub.f32 %v1516, %v1328
  %v1539 = vsub.f32 %v1517, %v1329
  %v1540 = vmul.f32 %v1536, %v1538
  %v1541 = vmul.f32 %v1537, %v1539
  %v1542 = vadd.f32 %v1328, %v1540
  %v1543 = vadd.f32 %v1329, %v1541
  %1544 = vmatprep.subr.mxu0 %v465
  %1545 = vmatpush1.msra.mxu0 %v464
  %1546 = vmatprep.subr.mxu0 %v462
  %1547 = vmatpush1.msra.mxu0 %v461
  %1548 = vmatprep.subr.mxu0 %v459
  %1549 = vmatpush1.msra.mxu0 %v458
  %1550 = vmatprep.subr.mxu0 %v456
  %1551 = vmatpush1.msra.mxu0 %v455
  %1552 = vmatprep.subr.mxu0 %v453
  %1553 = vmatpush1.msra.mxu0 %v452
  %1554 = vmatprep.subr.mxu0 %v450
  %1555 = vmatpush1.msra.mxu0 %v449
  %1556 = vmatprep.subr.mxu0 %v447
  %1557 = vmatpush1.msra.mxu0 %v446
  %1558 = vmatprep.subr.mxu0 %v444
  %1559 = vmatpush1.msra.mxu0 %v443
  %1560 = vmatprep.subr.mxu0 %v441
  %1561 = vmatpush1.msra.mxu0 %v440
  %1562 = vmatprep.subr.mxu0 %v438
  %1563 = vmatpush1.msra.mxu0 %v437
  %1564 = vmatprep.subr.mxu0 %v435
  %1565 = vmatpush1.msra.mxu0 %v434
  %1566 = vmatprep.subr.mxu0 %v432
  %1567 = vmatpush1.msra.mxu0 %v431
  %1568 = vmatprep.subr.mxu0 %v429
  %1569 = vmatpush1.msra.mxu0 %v428
  %1570 = vmatprep.subr.mxu0 %v426
  %1571 = vmatpush1.msra.mxu0 %v425
  %1572 = vmatprep.subr.mxu0 %v423
  %1573 = vmatpush1.msra.mxu0 %v422
  %1574 = vmatprep.subr.mxu0 %v420
  %1575 = vmatpush1.msra.mxu0 %v419
  %1576 = vmatprep.subr.mxu0 0.0
  %1577 = vmatpush2.msra.mxu0 0.0
  %1578 = vmatprep.subr.mxu0 0.0
  %1579 = vmatpush2.msra.mxu0 0.0
  %1580 = vmatprep.subr.mxu0 0.0
  %1581 = vmatpush2.msra.mxu0 0.0
  %1582 = vmatprep.subr.mxu0 0.0
  %1583 = vmatpush2.msra.mxu0 0.0
  %1584 = vmatprep.subr.mxu0 0.0
  %1585 = vmatpush2.msra.mxu0 0.0
  %1586 = vmatprep.subr.mxu0 0.0
  %1587 = vmatpush2.msra.mxu0 0.0
  %1588 = vmatprep.subr.mxu0 0.0
  %1589 = vmatpush2.msra.mxu0 0.0
  %1590 = vmatprep.subr.mxu0 0.0
  %1591 = vmatpush2.msra.mxu0 0.0
  %1592 = vmatprep.subr.mxu0 0.0
  %1593 = vmatpush2.msra.mxu0 0.0
  %1594 = vmatprep.subr.mxu0 0.0
  %1595 = vmatpush2.msra.mxu0 0.0
  %1596 = vmatprep.subr.mxu0 0.0
  %1597 = vmatpush2.msra.mxu0 0.0
  %1598 = vmatprep.subr.mxu0 0.0
  %1599 = vmatpush2.msra.mxu0 0.0
  %1600 = vmatprep.subr.mxu0 0.0
  %1601 = vmatpush2.msra.mxu0 0.0
  %1602 = vmatprep.subr.mxu0 0.0
  %1603 = vmatpush2.msra.mxu0 0.0
  %1604 = vmatprep.subr.mxu0 0.0
  %1605 = vmatpush2.msra.mxu0 0.0
  %1606 = vmatprep.subr.mxu0 0.0
  %1607 = vmatpush2.msra.mxu0 0.0
  %1608 = vmatprep.mubr.f32.mxu0 0.0
  %1609 = vmatmul.mubr.f32.gmra.mxu0 %v1542
  %v1610 = vpop.f32.mrf.mxu0
  %v1611 = vadd.f32 0.0, %v1610
  %v1612 = vpop.f32.mrf.mxu0
  %v1613 = vadd.f32 0.0, %v1612
  %1614 = vmatprep.mubr.f32.mxu0 0.0
  %1615 = vmatmul.mubr.f32.gmra.mxu0 %v1543
  %v1616 = vpop.f32.mrf.mxu0
  %v1617 = vadd.f32 0.0, %v1616
  %v1618 = vpop.f32.mrf.mxu0
  %v1619 = vadd.f32 0.0, %v1618
  %1620 = vdwg.mxu0
  %1621 = vmatprep.subr.mxu0 0.0
  %1622 = vmatpush1.msra.mxu0 %v466
  %1623 = vmatprep.subr.mxu0 0.0
  %1624 = vmatpush1.msra.mxu0 %v463
  %1625 = vmatprep.subr.mxu0 0.0
  %1626 = vmatpush1.msra.mxu0 %v460
  %1627 = vmatprep.subr.mxu0 0.0
  %1628 = vmatpush1.msra.mxu0 %v457
  %1629 = vmatprep.subr.mxu0 0.0
  %1630 = vmatpush1.msra.mxu0 %v454
  %1631 = vmatprep.subr.mxu0 0.0
  %1632 = vmatpush1.msra.mxu0 %v451
  %1633 = vmatprep.subr.mxu0 0.0
  %1634 = vmatpush1.msra.mxu0 %v448
  %1635 = vmatprep.subr.mxu0 0.0
  %1636 = vmatpush1.msra.mxu0 %v445
  %1637 = vmatprep.subr.mxu0 0.0
  %1638 = vmatpush1.msra.mxu0 %v442
  %1639 = vmatprep.subr.mxu0 0.0
  %1640 = vmatpush1.msra.mxu0 %v439
  %1641 = vmatprep.subr.mxu0 0.0
  %1642 = vmatpush1.msra.mxu0 %v436
  %1643 = vmatprep.subr.mxu0 0.0
  %1644 = vmatpush1.msra.mxu0 %v433
  %1645 = vmatprep.subr.mxu0 0.0
  %1646 = vmatpush1.msra.mxu0 %v430
  %1647 = vmatprep.subr.mxu0 0.0
  %1648 = vmatpush1.msra.mxu0 %v427
  %1649 = vmatprep.subr.mxu0 0.0
  %1650 = vmatpush1.msra.mxu0 %v424
  %1651 = vmatprep.subr.mxu0 0.0
  %1652 = vmatpush1.msra.mxu0 %v421
  %1653 = vmatprep.subr.mxu0 0.0
  %1654 = vmatpush2.msra.mxu0 0.0
  %1655 = vmatprep.subr.mxu0 0.0
  %1656 = vmatpush2.msra.mxu0 0.0
  %1657 = vmatprep.subr.mxu0 0.0
  %1658 = vmatpush2.msra.mxu0 0.0
  %1659 = vmatprep.subr.mxu0 0.0
  %1660 = vmatpush2.msra.mxu0 0.0
  %1661 = vmatprep.subr.mxu0 0.0
  %1662 = vmatpush2.msra.mxu0 0.0
  %1663 = vmatprep.subr.mxu0 0.0
  %1664 = vmatpush2.msra.mxu0 0.0
  %1665 = vmatprep.subr.mxu0 0.0
  %1666 = vmatpush2.msra.mxu0 0.0
  %1667 = vmatprep.subr.mxu0 0.0
  %1668 = vmatpush2.msra.mxu0 0.0
  %1669 = vmatprep.subr.mxu0 0.0
  %1670 = vmatpush2.msra.mxu0 0.0
  %1671 = vmatprep.subr.mxu0 0.0
  %1672 = vmatpush2.msra.mxu0 0.0
  %1673 = vmatprep.subr.mxu0 0.0
  %1674 = vmatpush2.msra.mxu0 0.0
  %1675 = vmatprep.subr.mxu0 0.0
  %1676 = vmatpush2.msra.mxu0 0.0
  %1677 = vmatprep.subr.mxu0 0.0
  %1678 = vmatpush2.msra.mxu0 0.0
  %1679 = vmatprep.subr.mxu0 0.0
  %1680 = vmatpush2.msra.mxu0 0.0
  %1681 = vmatprep.subr.mxu0 0.0
  %1682 = vmatpush2.msra.mxu0 0.0
  %1683 = vmatprep.subr.mxu0 0.0
  %1684 = vmatpush2.msra.mxu0 0.0
  %1685 = vmatprep.mubr.f32.mxu0 0.0
  %1686 = vmatmul.mubr.f32.gmra.mxu0 %v1542
  %v1687 = vpop.f32.mrf.mxu0
  %v1688 = vadd.f32 0.0, %v1687
  %v1689 = vpop.f32.mrf.mxu0
  %1690 = vmatprep.mubr.f32.mxu0 0.0
  %1691 = vmatmul.mubr.f32.gmra.mxu0 %v1543
  %v1692 = vpop.f32.mrf.mxu0
  %v1693 = vadd.f32 0.0, %v1692
  %v1694 = vpop.f32.mrf.mxu0
  %1695 = vdwg.mxu0
  %v1696 = vadd.f32 %v240, %v1611
  %v1697 = vadd.f32 %v246, %v1617
  %v1698 = vxor.u32 %v1696, 2147483648
  %v1699 = vxor.u32 %v1697, 2147483648
  %v1700 = vmul.f32 %v1698, 1.442695
  %v1701 = vpow.pop %v1700
  %v1702 = vmul.f32 %v1699, 1.442695
  %v1703 = vpow.pop %v1702
  %v1704 = vadd.f32 %v1701, 1.0
  %v1705 = vadd.f32 %v1703, 1.0
  %v1706 = vrcp.pop %v1704
  %v1707 = vmul.f32 1.0, %v1706
  %v1708 = vrcp.pop %v1705
  %v1709 = vmul.f32 1.0, %v1708
  %v1710 = vadd.f32 %v242, %v1613
  %v1711 = vadd.f32 %v248, %v1619
  %v1712 = vxor.u32 %v1710, 2147483648
  %v1713 = vxor.u32 %v1711, 2147483648
  %v1714 = vmul.f32 %v1712, 1.442695
  %v1715 = vpow.pop %v1714
  %v1716 = vmul.f32 %v1713, 1.442695
  %v1717 = vpow.pop %v1716
  %v1718 = vadd.f32 %v1715, 1.0
  %v1719 = vadd.f32 %v1717, 1.0
  %v1720 = vrcp.pop %v1718
  %v1721 = vmul.f32 1.0, %v1720
  %v1722 = vrcp.pop %v1719
  %v1723 = vmul.f32 1.0, %v1722
  %v1724 = vadd.f32 %v1688, %v472
  %v1725 = vadd.f32 %v1693, %v472
  %v1726 = vmul.f32 %v1707, %v1724
  %v1727 = vmul.f32 %v1709, %v1725
  %v1728 = vadd.f32 %v391, %v1726
  %v1729 = vadd.f32 %v396, %v1727
  %v1730 = vtanh.pop %v1728
  %v1731 = vtanh.pop %v1729
  %vm1732 = vcmp.gt.s32.totalorder %v474, 5
  %vm1733 = vcmp.gt.s32.totalorder %v475, 5
  %v1734 = vsel %vm1732, 1, 0
  %v1735 = vsel %vm1733, 1, 0
  %v1736 = vcvt.s32.f32 %v1734
  %v1737 = vcvt.s32.f32 %v1735
  %v1738 = vsub.f32 1.0, %v1721
  %v1739 = vsub.f32 1.0, %v1723
  %1741 = vset.pattern.permute.xlu0 0
  %1742 = vperm.xlu0 %1741, %v1736
  %v1743 = vpop.permute.xlu0 %1742
  %1746 = vset.pattern.permute.xlu0 0
  %1747 = vperm.xlu0 %1746, %v1737
  %v1748 = vpop.permute.xlu0 %1747
  %v1750 = vmul.f32 %v1743, %v1738
  %v1751 = vmul.f32 %v1748, %v1739
  %v1752 = vsub.f32 %v1730, %v1542
  %v1753 = vsub.f32 %v1731, %v1543
  %v1754 = vmul.f32 %v1750, %v1752
  %v1755 = vmul.f32 %v1751, %v1753
  %v1756 = vadd.f32 %v1542, %v1754
  %v1757 = vadd.f32 %v1543, %v1755
  %1758 = vmatprep.subr.mxu0 %v465
  %1759 = vmatpush1.msra.mxu0 %v464
  %1760 = vmatprep.subr.mxu0 %v462
  %1761 = vmatpush1.msra.mxu0 %v461
  %1762 = vmatprep.subr.mxu0 %v459
  %1763 = vmatpush1.msra.mxu0 %v458
  %1764 = vmatprep.subr.mxu0 %v456
  %1765 = vmatpush1.msra.mxu0 %v455
  %1766 = vmatprep.subr.mxu0 %v453
  %1767 = vmatpush1.msra.mxu0 %v452
  %1768 = vmatprep.subr.mxu0 %v450
  %1769 = vmatpush1.msra.mxu0 %v449
  %1770 = vmatprep.subr.mxu0 %v447
  %1771 = vmatpush1.msra.mxu0 %v446
  %1772 = vmatprep.subr.mxu0 %v444
  %1773 = vmatpush1.msra.mxu0 %v443
  %1774 = vmatprep.subr.mxu0 %v441
  %1775 = vmatpush1.msra.mxu0 %v440
  %1776 = vmatprep.subr.mxu0 %v438
  %1777 = vmatpush1.msra.mxu0 %v437
  %1778 = vmatprep.subr.mxu0 %v435
  %1779 = vmatpush1.msra.mxu0 %v434
  %1780 = vmatprep.subr.mxu0 %v432
  %1781 = vmatpush1.msra.mxu0 %v431
  %1782 = vmatprep.subr.mxu0 %v429
  %1783 = vmatpush1.msra.mxu0 %v428
  %1784 = vmatprep.subr.mxu0 %v426
  %1785 = vmatpush1.msra.mxu0 %v425
  %1786 = vmatprep.subr.mxu0 %v423
  %1787 = vmatpush1.msra.mxu0 %v422
  %1788 = vmatprep.subr.mxu0 %v420
  %1789 = vmatpush1.msra.mxu0 %v419
  %1790 = vmatprep.subr.mxu0 0.0
  %1791 = vmatpush2.msra.mxu0 0.0
  %1792 = vmatprep.subr.mxu0 0.0
  %1793 = vmatpush2.msra.mxu0 0.0
  %1794 = vmatprep.subr.mxu0 0.0
  %1795 = vmatpush2.msra.mxu0 0.0
  %1796 = vmatprep.subr.mxu0 0.0
  %1797 = vmatpush2.msra.mxu0 0.0
  %1798 = vmatprep.subr.mxu0 0.0
  %1799 = vmatpush2.msra.mxu0 0.0
  %1800 = vmatprep.subr.mxu0 0.0
  %1801 = vmatpush2.msra.mxu0 0.0
  %1802 = vmatprep.subr.mxu0 0.0
  %1803 = vmatpush2.msra.mxu0 0.0
  %1804 = vmatprep.subr.mxu0 0.0
  %1805 = vmatpush2.msra.mxu0 0.0
  %1806 = vmatprep.subr.mxu0 0.0
  %1807 = vmatpush2.msra.mxu0 0.0
  %1808 = vmatprep.subr.mxu0 0.0
  %1809 = vmatpush2.msra.mxu0 0.0
  %1810 = vmatprep.subr.mxu0 0.0
  %1811 = vmatpush2.msra.mxu0 0.0
  %1812 = vmatprep.subr.mxu0 0.0
  %1813 = vmatpush2.msra.mxu0 0.0
  %1814 = vmatprep.subr.mxu0 0.0
  %1815 = vmatpush2.msra.mxu0 0.0
  %1816 = vmatprep.subr.mxu0 0.0
  %1817 = vmatpush2.msra.mxu0 0.0
  %1818 = vmatprep.subr.mxu0 0.0
  %1819 = vmatpush2.msra.mxu0 0.0
  %1820 = vmatprep.subr.mxu0 0.0
  %1821 = vmatpush2.msra.mxu0 0.0
  %1822 = vmatprep.mubr.f32.mxu0 0.0
  %1823 = vmatmul.mubr.f32.gmra.mxu0 %v1756
  %v1824 = vpop.f32.mrf.mxu0
  %v1825 = vadd.f32 0.0, %v1824
  %v1826 = vpop.f32.mrf.mxu0
  %v1827 = vadd.f32 0.0, %v1826
  %1828 = vmatprep.mubr.f32.mxu0 0.0
  %1829 = vmatmul.mubr.f32.gmra.mxu0 %v1757
  %v1830 = vpop.f32.mrf.mxu0
  %v1831 = vadd.f32 0.0, %v1830
  %v1832 = vpop.f32.mrf.mxu0
  %v1833 = vadd.f32 0.0, %v1832
  %1834 = vdwg.mxu0
  %1835 = vmatprep.subr.mxu0 0.0
  %1836 = vmatpush1.msra.mxu0 %v466
  %1837 = vmatprep.subr.mxu0 0.0
  %1838 = vmatpush1.msra.mxu0 %v463
  %1839 = vmatprep.subr.mxu0 0.0
  %1840 = vmatpush1.msra.mxu0 %v460
  %1841 = vmatprep.subr.mxu0 0.0
  %1842 = vmatpush1.msra.mxu0 %v457
  %1843 = vmatprep.subr.mxu0 0.0
  %1844 = vmatpush1.msra.mxu0 %v454
  %1845 = vmatprep.subr.mxu0 0.0
  %1846 = vmatpush1.msra.mxu0 %v451
  %1847 = vmatprep.subr.mxu0 0.0
  %1848 = vmatpush1.msra.mxu0 %v448
  %1849 = vmatprep.subr.mxu0 0.0
  %1850 = vmatpush1.msra.mxu0 %v445
  %1851 = vmatprep.subr.mxu0 0.0
  %1852 = vmatpush1.msra.mxu0 %v442
  %1853 = vmatprep.subr.mxu0 0.0
  %1854 = vmatpush1.msra.mxu0 %v439
  %1855 = vmatprep.subr.mxu0 0.0
  %1856 = vmatpush1.msra.mxu0 %v436
  %1857 = vmatprep.subr.mxu0 0.0
  %1858 = vmatpush1.msra.mxu0 %v433
  %1859 = vmatprep.subr.mxu0 0.0
  %1860 = vmatpush1.msra.mxu0 %v430
  %1861 = vmatprep.subr.mxu0 0.0
  %1862 = vmatpush1.msra.mxu0 %v427
  %1863 = vmatprep.subr.mxu0 0.0
  %1864 = vmatpush1.msra.mxu0 %v424
  %1865 = vmatprep.subr.mxu0 0.0
  %1866 = vmatpush1.msra.mxu0 %v421
  %1867 = vmatprep.subr.mxu0 0.0
  %1868 = vmatpush2.msra.mxu0 0.0
  %1869 = vmatprep.subr.mxu0 0.0
  %1870 = vmatpush2.msra.mxu0 0.0
  %1871 = vmatprep.subr.mxu0 0.0
  %1872 = vmatpush2.msra.mxu0 0.0
  %1873 = vmatprep.subr.mxu0 0.0
  %1874 = vmatpush2.msra.mxu0 0.0
  %1875 = vmatprep.subr.mxu0 0.0
  %1876 = vmatpush2.msra.mxu0 0.0
  %1877 = vmatprep.subr.mxu0 0.0
  %1878 = vmatpush2.msra.mxu0 0.0
  %1879 = vmatprep.subr.mxu0 0.0
  %1880 = vmatpush2.msra.mxu0 0.0
  %1881 = vmatprep.subr.mxu0 0.0
  %1882 = vmatpush2.msra.mxu0 0.0
  %1883 = vmatprep.subr.mxu0 0.0
  %1884 = vmatpush2.msra.mxu0 0.0
  %1885 = vmatprep.subr.mxu0 0.0
  %1886 = vmatpush2.msra.mxu0 0.0
  %1887 = vmatprep.subr.mxu0 0.0
  %1888 = vmatpush2.msra.mxu0 0.0
  %1889 = vmatprep.subr.mxu0 0.0
  %1890 = vmatpush2.msra.mxu0 0.0
  %1891 = vmatprep.subr.mxu0 0.0
  %1892 = vmatpush2.msra.mxu0 0.0
  %1893 = vmatprep.subr.mxu0 0.0
  %1894 = vmatpush2.msra.mxu0 0.0
  %1895 = vmatprep.subr.mxu0 0.0
  %1896 = vmatpush2.msra.mxu0 0.0
  %1897 = vmatprep.subr.mxu0 0.0
  %1898 = vmatpush2.msra.mxu0 0.0
  %1899 = vmatprep.mubr.f32.mxu0 0.0
  %1900 = vmatmul.mubr.f32.gmra.mxu0 %v1756
  %v1901 = vpop.f32.mrf.mxu0
  %v1902 = vadd.f32 0.0, %v1901
  %v1903 = vpop.f32.mrf.mxu0
  %1904 = vmatprep.mubr.f32.mxu0 0.0
  %1905 = vmatmul.mubr.f32.gmra.mxu0 %v1757
  %v1906 = vpop.f32.mrf.mxu0
  %v1907 = vadd.f32 0.0, %v1906
  %v1908 = vpop.f32.mrf.mxu0
  %1909 = vdwg.mxu0
  %v1910 = vadd.f32 %v252, %v1825
  %v1911 = vadd.f32 %v258, %v1831
  %v1912 = vxor.u32 %v1910, 2147483648
  %v1913 = vxor.u32 %v1911, 2147483648
  %v1914 = vmul.f32 %v1912, 1.442695
  %v1915 = vpow.pop %v1914
  %v1916 = vmul.f32 %v1913, 1.442695
  %v1917 = vpow.pop %v1916
  %v1918 = vadd.f32 %v1915, 1.0
  %v1919 = vadd.f32 %v1917, 1.0
  %v1920 = vrcp.pop %v1918
  %v1921 = vmul.f32 1.0, %v1920
  %v1922 = vrcp.pop %v1919
  %v1923 = vmul.f32 1.0, %v1922
  %v1924 = vadd.f32 %v254, %v1827
  %v1925 = vadd.f32 %v260, %v1833
  %v1926 = vxor.u32 %v1924, 2147483648
  %v1927 = vxor.u32 %v1925, 2147483648
  %v1928 = vmul.f32 %v1926, 1.442695
  %v1929 = vpow.pop %v1928
  %v1930 = vmul.f32 %v1927, 1.442695
  %v1931 = vpow.pop %v1930
  %v1932 = vadd.f32 %v1929, 1.0
  %v1933 = vadd.f32 %v1931, 1.0
  %v1934 = vrcp.pop %v1932
  %v1935 = vmul.f32 1.0, %v1934
  %v1936 = vrcp.pop %v1933
  %v1937 = vmul.f32 1.0, %v1936
  %v1938 = vadd.f32 %v1902, %v472
  %v1939 = vadd.f32 %v1907, %v472
  %v1940 = vmul.f32 %v1921, %v1938
  %v1941 = vmul.f32 %v1923, %v1939
  %v1942 = vadd.f32 %v401, %v1940
  %v1943 = vadd.f32 %v406, %v1941
  %v1944 = vtanh.pop %v1942
  %v1945 = vtanh.pop %v1943
  %vm1946 = vcmp.gt.s32.totalorder %v474, 6
  %vm1947 = vcmp.gt.s32.totalorder %v475, 6
  %v1948 = vsel %vm1946, 1, 0
  %v1949 = vsel %vm1947, 1, 0
  %v1950 = vcvt.s32.f32 %v1948
  %v1951 = vcvt.s32.f32 %v1949
  %v1952 = vsub.f32 1.0, %v1935
  %v1953 = vsub.f32 1.0, %v1937
  %1955 = vset.pattern.permute.xlu0 0
  %1956 = vperm.xlu0 %1955, %v1950
  %v1957 = vpop.permute.xlu0 %1956
  %1960 = vset.pattern.permute.xlu0 0
  %1961 = vperm.xlu0 %1960, %v1951
  %v1962 = vpop.permute.xlu0 %1961
  %v1964 = vmul.f32 %v1957, %v1952
  %v1965 = vmul.f32 %v1962, %v1953
  %v1966 = vsub.f32 %v1944, %v1756
  %v1967 = vsub.f32 %v1945, %v1757
  %v1968 = vmul.f32 %v1964, %v1966
  %v1969 = vmul.f32 %v1965, %v1967
  %v1970 = vadd.f32 %v1756, %v1968
  %v1971 = vadd.f32 %v1757, %v1969
  %1972 = vmatprep.subr.mxu0 %v465
  %1973 = vmatpush1.msra.mxu0 %v464
  %1974 = vmatprep.subr.mxu0 %v462
  %1975 = vmatpush1.msra.mxu0 %v461
  %1976 = vmatprep.subr.mxu0 %v459
  %1977 = vmatpush1.msra.mxu0 %v458
  %1978 = vmatprep.subr.mxu0 %v456
  %1979 = vmatpush1.msra.mxu0 %v455
  %1980 = vmatprep.subr.mxu0 %v453
  %1981 = vmatpush1.msra.mxu0 %v452
  %1982 = vmatprep.subr.mxu0 %v450
  %1983 = vmatpush1.msra.mxu0 %v449
  %1984 = vmatprep.subr.mxu0 %v447
  %1985 = vmatpush1.msra.mxu0 %v446
  %1986 = vmatprep.subr.mxu0 %v444
  %1987 = vmatpush1.msra.mxu0 %v443
  %1988 = vmatprep.subr.mxu0 %v441
  %1989 = vmatpush1.msra.mxu0 %v440
  %1990 = vmatprep.subr.mxu0 %v438
  %1991 = vmatpush1.msra.mxu0 %v437
  %1992 = vmatprep.subr.mxu0 %v435
  %1993 = vmatpush1.msra.mxu0 %v434
  %1994 = vmatprep.subr.mxu0 %v432
  %1995 = vmatpush1.msra.mxu0 %v431
  %1996 = vmatprep.subr.mxu0 %v429
  %1997 = vmatpush1.msra.mxu0 %v428
  %1998 = vmatprep.subr.mxu0 %v426
  %1999 = vmatpush1.msra.mxu0 %v425
  %2000 = vmatprep.subr.mxu0 %v423
  %2001 = vmatpush1.msra.mxu0 %v422
  %2002 = vmatprep.subr.mxu0 %v420
  %2003 = vmatpush1.msra.mxu0 %v419
  %2004 = vmatprep.subr.mxu0 0.0
  %2005 = vmatpush2.msra.mxu0 0.0
  %2006 = vmatprep.subr.mxu0 0.0
  %2007 = vmatpush2.msra.mxu0 0.0
  %2008 = vmatprep.subr.mxu0 0.0
  %2009 = vmatpush2.msra.mxu0 0.0
  %2010 = vmatprep.subr.mxu0 0.0
  %2011 = vmatpush2.msra.mxu0 0.0
  %2012 = vmatprep.subr.mxu0 0.0
  %2013 = vmatpush2.msra.mxu0 0.0
  %2014 = vmatprep.subr.mxu0 0.0
  %2015 = vmatpush2.msra.mxu0 0.0
  %2016 = vmatprep.subr.mxu0 0.0
  %2017 = vmatpush2.msra.mxu0 0.0
  %2018 = vmatprep.subr.mxu0 0.0
  %2019 = vmatpush2.msra.mxu0 0.0
  %2020 = vmatprep.subr.mxu0 0.0
  %2021 = vmatpush2.msra.mxu0 0.0
  %2022 = vmatprep.subr.mxu0 0.0
  %2023 = vmatpush2.msra.mxu0 0.0
  %2024 = vmatprep.subr.mxu0 0.0
  %2025 = vmatpush2.msra.mxu0 0.0
  %2026 = vmatprep.subr.mxu0 0.0
  %2027 = vmatpush2.msra.mxu0 0.0
  %2028 = vmatprep.subr.mxu0 0.0
  %2029 = vmatpush2.msra.mxu0 0.0
  %2030 = vmatprep.subr.mxu0 0.0
  %2031 = vmatpush2.msra.mxu0 0.0
  %2032 = vmatprep.subr.mxu0 0.0
  %2033 = vmatpush2.msra.mxu0 0.0
  %2034 = vmatprep.subr.mxu0 0.0
  %2035 = vmatpush2.msra.mxu0 0.0
  %2036 = vmatprep.mubr.f32.mxu0 0.0
  %2037 = vmatmul.mubr.f32.gmra.mxu0 %v1970
  %v2038 = vpop.f32.mrf.mxu0
  %v2039 = vadd.f32 0.0, %v2038
  %v2040 = vpop.f32.mrf.mxu0
  %v2041 = vadd.f32 0.0, %v2040
  %2042 = vmatprep.mubr.f32.mxu0 0.0
  %2043 = vmatmul.mubr.f32.gmra.mxu0 %v1971
  %v2044 = vpop.f32.mrf.mxu0
  %v2045 = vadd.f32 0.0, %v2044
  %v2046 = vpop.f32.mrf.mxu0
  %v2047 = vadd.f32 0.0, %v2046
  %2048 = vdwg.mxu0
  %2049 = vmatprep.subr.mxu0 0.0
  %2050 = vmatpush1.msra.mxu0 %v466
  %2051 = vmatprep.subr.mxu0 0.0
  %2052 = vmatpush1.msra.mxu0 %v463
  %2053 = vmatprep.subr.mxu0 0.0
  %2054 = vmatpush1.msra.mxu0 %v460
  %2055 = vmatprep.subr.mxu0 0.0
  %2056 = vmatpush1.msra.mxu0 %v457
  %2057 = vmatprep.subr.mxu0 0.0
  %2058 = vmatpush1.msra.mxu0 %v454
  %2059 = vmatprep.subr.mxu0 0.0
  %2060 = vmatpush1.msra.mxu0 %v451
  %2061 = vmatprep.subr.mxu0 0.0
  %2062 = vmatpush1.msra.mxu0 %v448
  %2063 = vmatprep.subr.mxu0 0.0
  %2064 = vmatpush1.msra.mxu0 %v445
  %2065 = vmatprep.subr.mxu0 0.0
  %2066 = vmatpush1.msra.mxu0 %v442
  %2067 = vmatprep.subr.mxu0 0.0
  %2068 = vmatpush1.msra.mxu0 %v439
  %2069 = vmatprep.subr.mxu0 0.0
  %2070 = vmatpush1.msra.mxu0 %v436
  %2071 = vmatprep.subr.mxu0 0.0
  %2072 = vmatpush1.msra.mxu0 %v433
  %2073 = vmatprep.subr.mxu0 0.0
  %2074 = vmatpush1.msra.mxu0 %v430
  %2075 = vmatprep.subr.mxu0 0.0
  %2076 = vmatpush1.msra.mxu0 %v427
  %2077 = vmatprep.subr.mxu0 0.0
  %2078 = vmatpush1.msra.mxu0 %v424
  %2079 = vmatprep.subr.mxu0 0.0
  %2080 = vmatpush1.msra.mxu0 %v421
  %2081 = vmatprep.subr.mxu0 0.0
  %2082 = vmatpush2.msra.mxu0 0.0
  %2083 = vmatprep.subr.mxu0 0.0
  %2084 = vmatpush2.msra.mxu0 0.0
  %2085 = vmatprep.subr.mxu0 0.0
  %2086 = vmatpush2.msra.mxu0 0.0
  %2087 = vmatprep.subr.mxu0 0.0
  %2088 = vmatpush2.msra.mxu0 0.0
  %2089 = vmatprep.subr.mxu0 0.0
  %2090 = vmatpush2.msra.mxu0 0.0
  %2091 = vmatprep.subr.mxu0 0.0
  %2092 = vmatpush2.msra.mxu0 0.0
  %2093 = vmatprep.subr.mxu0 0.0
  %2094 = vmatpush2.msra.mxu0 0.0
  %2095 = vmatprep.subr.mxu0 0.0
  %2096 = vmatpush2.msra.mxu0 0.0
  %2097 = vmatprep.subr.mxu0 0.0
  %2098 = vmatpush2.msra.mxu0 0.0
  %2099 = vmatprep.subr.mxu0 0.0
  %2100 = vmatpush2.msra.mxu0 0.0
  %2101 = vmatprep.subr.mxu0 0.0
  %2102 = vmatpush2.msra.mxu0 0.0
  %2103 = vmatprep.subr.mxu0 0.0
  %2104 = vmatpush2.msra.mxu0 0.0
  %2105 = vmatprep.subr.mxu0 0.0
  %2106 = vmatpush2.msra.mxu0 0.0
  %2107 = vmatprep.subr.mxu0 0.0
  %2108 = vmatpush2.msra.mxu0 0.0
  %2109 = vmatprep.subr.mxu0 0.0
  %2110 = vmatpush2.msra.mxu0 0.0
  %2111 = vmatprep.subr.mxu0 0.0
  %2112 = vmatpush2.msra.mxu0 0.0
  %2113 = vmatprep.mubr.f32.mxu0 0.0
  %2114 = vmatmul.mubr.f32.gmra.mxu0 %v1970
  %v2115 = vpop.f32.mrf.mxu0
  %v2116 = vadd.f32 0.0, %v2115
  %v2117 = vpop.f32.mrf.mxu0
  %2118 = vmatprep.mubr.f32.mxu0 0.0
  %2119 = vmatmul.mubr.f32.gmra.mxu0 %v1971
  %v2120 = vpop.f32.mrf.mxu0
  %v2121 = vadd.f32 0.0, %v2120
  %v2122 = vpop.f32.mrf.mxu0
  %2123 = vdwg.mxu0
  %v2124 = vadd.f32 %v264, %v2039
  %v2125 = vadd.f32 %v270, %v2045
  %v2126 = vxor.u32 %v2124, 2147483648
  %v2127 = vxor.u32 %v2125, 2147483648
  %v2128 = vmul.f32 %v2126, 1.442695
  %v2129 = vpow.pop %v2128
  %v2130 = vmul.f32 %v2127, 1.442695
  %v2131 = vpow.pop %v2130
  %v2132 = vadd.f32 %v2129, 1.0
  %v2133 = vadd.f32 %v2131, 1.0
  %v2134 = vrcp.pop %v2132
  %v2135 = vmul.f32 1.0, %v2134
  %v2136 = vrcp.pop %v2133
  %v2137 = vmul.f32 1.0, %v2136
  %v2138 = vadd.f32 %v266, %v2041
  %v2139 = vadd.f32 %v272, %v2047
  %v2140 = vxor.u32 %v2138, 2147483648
  %v2141 = vxor.u32 %v2139, 2147483648
  %v2142 = vmul.f32 %v2140, 1.442695
  %v2143 = vpow.pop %v2142
  %v2144 = vmul.f32 %v2141, 1.442695
  %v2145 = vpow.pop %v2144
  %v2146 = vadd.f32 %v2143, 1.0
  %v2147 = vadd.f32 %v2145, 1.0
  %v2148 = vrcp.pop %v2146
  %v2149 = vmul.f32 1.0, %v2148
  %v2150 = vrcp.pop %v2147
  %v2151 = vmul.f32 1.0, %v2150
  %v2152 = vadd.f32 %v2116, %v472
  %v2153 = vadd.f32 %v2121, %v472
  %v2154 = vmul.f32 %v2135, %v2152
  %v2155 = vmul.f32 %v2137, %v2153
  %v2156 = vadd.f32 %v411, %v2154
  %v2157 = vadd.f32 %v416, %v2155
  %v2158 = vtanh.pop %v2156
  %v2159 = vtanh.pop %v2157
  %vm2160 = vcmp.gt.s32.totalorder %v474, 7
  %vm2161 = vcmp.gt.s32.totalorder %v475, 7
  %v2162 = vsel %vm2160, 1, 0
  %v2163 = vsel %vm2161, 1, 0
  %v2164 = vcvt.s32.f32 %v2162
  %v2165 = vcvt.s32.f32 %v2163
  %v2166 = vsub.f32 1.0, %v2149
  %v2167 = vsub.f32 1.0, %v2151
  %2169 = vset.pattern.permute.xlu0 0
  %2170 = vperm.xlu0 %2169, %v2164
  %v2171 = vpop.permute.xlu0 %2170
  %2174 = vset.pattern.permute.xlu0 0
  %2175 = vperm.xlu0 %2174, %v2165
  %v2176 = vpop.permute.xlu0 %2175
  %v2178 = vmul.f32 %v2171, %v2166
  %v2179 = vmul.f32 %v2176, %v2167
  %v2180 = vsub.f32 %v2158, %v1970
  %v2181 = vsub.f32 %v2159, %v1971
  %v2182 = vmul.f32 %v2178, %v2180
  %v2183 = vmul.f32 %v2179, %v2181
  %v2184 = vadd.f32 %v1970, %v2182
  %v2185 = vadd.f32 %v1971, %v2183
  %v2186 = vld [vmem:[%s6] sm:$0xff]
  %v2187 = vld [vmem:[%s6 + $0x8] sm:$0xff]
  %v2188 = vld [vmem:[%s6 + $0x10] sm:$0xff]
  %v2189 = vld [vmem:[%s6 + $0x18] sm:$0xff]
  %v2190 = vld [vmem:[%s6 + $0x20] sm:$0xff]
  %v2191 = vld [vmem:[%s6 + $0x28] sm:$0xff]
  %v2192 = vld [vmem:[%s6 + $0x30] sm:$0xff]
  %v2193 = vld [vmem:[%s6 + $0x38] sm:$0xff]
  %v2194 = vld [vmem:[%s6 + $0x40] sm:$0xff]
  %v2195 = vld [vmem:[%s6 + $0x48] sm:$0xff]
  %v2196 = vld [vmem:[%s6 + $0x50] sm:$0xff]
  %v2197 = vld [vmem:[%s6 + $0x58] sm:$0xff]
  %v2198 = vld [vmem:[%s6 + $0x60] sm:$0xff]
  %v2199 = vld [vmem:[%s6 + $0x68] sm:$0xff]
  %v2200 = vld [vmem:[%s6 + $0x70] sm:$0xff]
  %v2201 = vld [vmem:[%s6 + $0x78] sm:$0xff]
  %v2202 = vld [vmem:[%s7] sm:$0xff]
  %v2203 = vld [vmem:[%s7 + $0x8] sm:$0xff]
  %v2204 = vld [vmem:[%s7 + $0x10] sm:$0xff]
  %v2205 = vld [vmem:[%s7 + $0x18] sm:$0xff]
  %v2206 = vld [vmem:[%s7 + $0x20] sm:$0xff]
  %v2207 = vld [vmem:[%s7 + $0x28] sm:$0xff]
  %v2208 = vld [vmem:[%s7 + $0x30] sm:$0xff]
  %v2209 = vld [vmem:[%s7 + $0x38] sm:$0xff]
  %v2210 = vld [vmem:[%s7 + $0x40] sm:$0xff]
  %v2211 = vld [vmem:[%s7 + $0x48] sm:$0xff]
  %v2212 = vld [vmem:[%s7 + $0x50] sm:$0xff]
  %v2213 = vld [vmem:[%s7 + $0x58] sm:$0xff]
  %v2214 = vld [vmem:[%s7 + $0x60] sm:$0xff]
  %v2215 = vld [vmem:[%s7 + $0x68] sm:$0xff]
  %v2216 = vld [vmem:[%s7 + $0x70] sm:$0xff]
  %v2217 = vld [vmem:[%s7 + $0x78] sm:$0xff]
  %2218 = vmatprep.subr.mxu0 0.0
  %2219 = vmatpush1.msra.mxu0 %v2217
  %2220 = vmatprep.subr.mxu0 0.0
  %2221 = vmatpush1.msra.mxu0 %v2216
  %2222 = vmatprep.subr.mxu0 0.0
  %2223 = vmatpush1.msra.mxu0 %v2215
  %2224 = vmatprep.subr.mxu0 0.0
  %2225 = vmatpush1.msra.mxu0 %v2214
  %2226 = vmatprep.subr.mxu0 0.0
  %2227 = vmatpush1.msra.mxu0 %v2213
  %2228 = vmatprep.subr.mxu0 0.0
  %2229 = vmatpush1.msra.mxu0 %v2212
  %2230 = vmatprep.subr.mxu0 0.0
  %2231 = vmatpush1.msra.mxu0 %v2211
  %2232 = vmatprep.subr.mxu0 0.0
  %2233 = vmatpush1.msra.mxu0 %v2210
  %2234 = vmatprep.subr.mxu0 0.0
  %2235 = vmatpush1.msra.mxu0 %v2209
  %2236 = vmatprep.subr.mxu0 0.0
  %2237 = vmatpush1.msra.mxu0 %v2208
  %2238 = vmatprep.subr.mxu0 0.0
  %2239 = vmatpush1.msra.mxu0 %v2207
  %2240 = vmatprep.subr.mxu0 0.0
  %2241 = vmatpush1.msra.mxu0 %v2206
  %2242 = vmatprep.subr.mxu0 0.0
  %2243 = vmatpush1.msra.mxu0 %v2205
  %2244 = vmatprep.subr.mxu0 0.0
  %2245 = vmatpush1.msra.mxu0 %v2204
  %2246 = vmatprep.subr.mxu0 0.0
  %2247 = vmatpush1.msra.mxu0 %v2203
  %2248 = vmatprep.subr.mxu0 0.0
  %2249 = vmatpush1.msra.mxu0 %v2202
  %2250 = vmatprep.subr.mxu0 0.0
  %2251 = vmatpush2.msra.mxu0 0.0
  %2252 = vmatprep.subr.mxu0 0.0
  %2253 = vmatpush2.msra.mxu0 0.0
  %2254 = vmatprep.subr.mxu0 0.0
  %2255 = vmatpush2.msra.mxu0 0.0
  %2256 = vmatprep.subr.mxu0 0.0
  %2257 = vmatpush2.msra.mxu0 0.0
  %2258 = vmatprep.subr.mxu0 0.0
  %2259 = vmatpush2.msra.mxu0 0.0
  %2260 = vmatprep.subr.mxu0 0.0
  %2261 = vmatpush2.msra.mxu0 0.0
  %2262 = vmatprep.subr.mxu0 0.0
  %2263 = vmatpush2.msra.mxu0 0.0
  %2264 = vmatprep.subr.mxu0 0.0
  %2265 = vmatpush2.msra.mxu0 0.0
  %2266 = vmatprep.subr.mxu0 0.0
  %2267 = vmatpush2.msra.mxu0 0.0
  %2268 = vmatprep.subr.mxu0 0.0
  %2269 = vmatpush2.msra.mxu0 0.0
  %2270 = vmatprep.subr.mxu0 0.0
  %2271 = vmatpush2.msra.mxu0 0.0
  %2272 = vmatprep.subr.mxu0 0.0
  %2273 = vmatpush2.msra.mxu0 0.0
  %2274 = vmatprep.subr.mxu0 0.0
  %2275 = vmatpush2.msra.mxu0 0.0
  %2276 = vmatprep.subr.mxu0 0.0
  %2277 = vmatpush2.msra.mxu0 0.0
  %2278 = vmatprep.subr.mxu0 0.0
  %2279 = vmatpush2.msra.mxu0 0.0
  %2280 = vmatprep.subr.mxu0 0.0
  %2281 = vmatpush2.msra.mxu0 0.0
  %2282 = vmatprep.mubr.f32.mxu0 0.0
  %2283 = vmatmul.mubr.f32.gmra.mxu0 %v2185
  %v2284 = vpop.f32.mrf.mxu0
  %v2285 = vadd.f32 0.0, %v2284
  %v2286 = vpop.f32.mrf.mxu0
  %2287 = vdwg.mxu0
  %2288 = vmatprep.subr.mxu0 0.0
  %2289 = vmatpush1.msra.mxu0 %v2201
  %2290 = vmatprep.subr.mxu0 0.0
  %2291 = vmatpush1.msra.mxu0 %v2200
  %2292 = vmatprep.subr.mxu0 0.0
  %2293 = vmatpush1.msra.mxu0 %v2199
  %2294 = vmatprep.subr.mxu0 0.0
  %2295 = vmatpush1.msra.mxu0 %v2198
  %2296 = vmatprep.subr.mxu0 0.0
  %2297 = vmatpush1.msra.mxu0 %v2197
  %2298 = vmatprep.subr.mxu0 0.0
  %2299 = vmatpush1.msra.mxu0 %v2196
  %2300 = vmatprep.subr.mxu0 0.0
  %2301 = vmatpush1.msra.mxu0 %v2195
  %2302 = vmatprep.subr.mxu0 0.0
  %2303 = vmatpush1.msra.mxu0 %v2194
  %2304 = vmatprep.subr.mxu0 0.0
  %2305 = vmatpush1.msra.mxu0 %v2193
  %2306 = vmatprep.subr.mxu0 0.0
  %2307 = vmatpush1.msra.mxu0 %v2192
  %2308 = vmatprep.subr.mxu0 0.0
  %2309 = vmatpush1.msra.mxu0 %v2191
  %2310 = vmatprep.subr.mxu0 0.0
  %2311 = vmatpush1.msra.mxu0 %v2190
  %2312 = vmatprep.subr.mxu0 0.0
  %2313 = vmatpush1.msra.mxu0 %v2189
  %2314 = vmatprep.subr.mxu0 0.0
  %2315 = vmatpush1.msra.mxu0 %v2188
  %2316 = vmatprep.subr.mxu0 0.0
  %2317 = vmatpush1.msra.mxu0 %v2187
  %2318 = vmatprep.subr.mxu0 0.0
  %2319 = vmatpush1.msra.mxu0 %v2186
  %2320 = vmatprep.subr.mxu0 0.0
  %2321 = vmatpush2.msra.mxu0 0.0
  %2322 = vmatprep.subr.mxu0 0.0
  %2323 = vmatpush2.msra.mxu0 0.0
  %2324 = vmatprep.subr.mxu0 0.0
  %2325 = vmatpush2.msra.mxu0 0.0
  %2326 = vmatprep.subr.mxu0 0.0
  %2327 = vmatpush2.msra.mxu0 0.0
  %2328 = vmatprep.subr.mxu0 0.0
  %2329 = vmatpush2.msra.mxu0 0.0
  %2330 = vmatprep.subr.mxu0 0.0
  %2331 = vmatpush2.msra.mxu0 0.0
  %2332 = vmatprep.subr.mxu0 0.0
  %2333 = vmatpush2.msra.mxu0 0.0
  %2334 = vmatprep.subr.mxu0 0.0
  %2335 = vmatpush2.msra.mxu0 0.0
  %2336 = vmatprep.subr.mxu0 0.0
  %2337 = vmatpush2.msra.mxu0 0.0
  %2338 = vmatprep.subr.mxu0 0.0
  %2339 = vmatpush2.msra.mxu0 0.0
  %2340 = vmatprep.subr.mxu0 0.0
  %2341 = vmatpush2.msra.mxu0 0.0
  %2342 = vmatprep.subr.mxu0 0.0
  %2343 = vmatpush2.msra.mxu0 0.0
  %2344 = vmatprep.subr.mxu0 0.0
  %2345 = vmatpush2.msra.mxu0 0.0
  %2346 = vmatprep.subr.mxu0 0.0
  %2347 = vmatpush2.msra.mxu0 0.0
  %2348 = vmatprep.subr.mxu0 0.0
  %2349 = vmatpush2.msra.mxu0 0.0
  %2350 = vmatprep.subr.mxu0 0.0
  %2351 = vmatpush2.msra.mxu0 0.0
  %2352 = vmatprep.mubr.f32.mxu0 0.0
  %2353 = vmatmul.mubr.f32.gmra.mxu0 %v2184
  %v2354 = vpop.f32.mrf.mxu0
  %v2355 = vadd.f32 %v2285, %v2354
  %v2356 = vpop.f32.mrf.mxu0
  %2357 = vdwg.mxu0
  %v2358 = vld [vmem:[%s8] sm:$0x1]
  %v2360 = vlaneseq
  %v2361 = vshrl.u32 %v2360, 7
  %v2362 = vsub.s32 0, %v2361
  %v2363 = vrot.slane %v2358, %v2362
  %v2365 = vadd.f32 %v2355, %v2363
  %vm2366 = vcmask 15360
  %v2367 = vsel %vm2366, %v2365, -inf
  %2368 = vmax.xlane.f32.xlu0 %v2367
  %v2369 = vpop.xlane.xlu0 %2368
  %v2370 = vsub.f32 %v2365, %v2369
  %v2371 = vmul.f32 %v2370, 1.442695
  %v2372 = vpow.pop %v2371
  %v2373 = vsel %vm2366, %v2372, 0.0
  %2374 = vadd.xlane.f32.xlu0 %v2373
  %v2375 = vpop.xlane.xlu0 %2374
  %v2376 = vrcp.pop %v2375
  %v2377 = vmul.f32 %v2372, %v2376
  %2378 = vst.msk [vmem:[%s9] sm:$0xff] %vm2366, %v2377
  // Predicated region
  $region38: #{rnn_pair_classify.1} parent=0 // pred_check
    _
  $region39: #{rnn_pair_classify.1} parent=0 // pred_check_branch
    %2380 = sbr.rel (0) target = $region41
  $region40: #{rnn_pair_classify.1} parent=0 // pred_region
    _
  $region41: #{rnn_pair_classify.1} parent=0 // pred_fallthru
    _
  // Predicated region
  $region42: #{rnn_pair_classify.1} parent=0 // pred_check
    _
  $region43: #{rnn_pair_classify.1} parent=0 // pred_check_branch
    %2382 = sbr.rel (0) target = $region45
  $region44: #{rnn_pair_classify.1} parent=0 // pred_region
    _
  $region45: #{rnn_pair_classify.1} parent=0 // pred_fallthru
    _

</llo_original>
